<compile_context>
chip_gen: v7x
topology: tpu7x:2x2x1
jax: 0.10.0
libtpu: 0.0.40
codegen_flags: <defaults>
</compile_context>

<pallas_src>
import math
import numpy as np
import jax
import jax.numpy as jnp
from jax import lax
from jax.experimental import pallas as pl
from jax.experimental.pallas import tpu as pltpu

# ---- model dimensions (small, deterministic synthetic instance) ----
P = 4            # input feature dim p
HIDDEN = 32      # hidden_dim
LATENT = 8       # latent_dim
SEQ_LEN = 8      # seq_len
TRI = LATENT * (LATENT + 1) // 2   # number of upper-triangular entries

# matrix-exp parameters: scaling s=3 + degree-12 Taylor (Paterson-Stockmeyer).
# ||m||_1 is O(1) here, so the scaled Taylor remainder is far below f32 eps.
N_SQUARINGS = 3
TAYLOR_DEG = 12

# bf16 weight-slab row offsets (16-row aligned: bf16 sublane tiles are 16 rows)
_W_IN_R, _WHH_R, _WG_R, _WI_R, _WHEAD_R = 0, 16, 80, 160, 192
_W_ROWS = 224
# f32 constant-slab row offsets
_ERCAT_R, _ECAT_R = 8, 16
_C_ROWS = 16 + 2 * TRI          # 88


# --------------------------- Pallas kernel ---------------------------
def _inference_kernel(data_ref, w_ref, c_ref, out_ref):
    H, D, S = HIDDEN, LATENT, SEQ_LEN
    f32, bf16 = jnp.float32, jnp.bfloat16

    # ---- static views into the packed parameter slabs ----
    w_in = w_ref[_W_IN_R:_W_IN_R + 2 * P, :]               # (2P, 6H)   bf16
    whh = w_ref[_WHH_R:_WHH_R + 2 * H, :]                  # (2H, 6H)   bf16
    wg = w_ref[_WG_R:_WG_R + D + 2 * H, 0:3 * H]           # (L+2H, 3H) bf16
    wi = w_ref[_WI_R:_WI_R + H, 0:H]                       # (H, H)     bf16
    whead = w_ref[_WHEAD_R:_WHEAD_R + H, 0:D + TRI]        # (H, D+TRI) bf16

    b_in = c_ref[0:1, :]                                   # (1, 6H)   f32
    bhh = c_ref[1:2, :]                                    # (1, 6H)   f32
    bg_ih = c_ref[2:3, 0:3 * H]                            # (1, 3H)   f32
    bg_hh = c_ref[3:4, 0:3 * H]                            # (1, 3H)   f32
    bi = c_ref[4:5, 0:H]                                   # (1, H)    f32
    bhead = c_ref[5:6, 0:D + TRI]                          # (1, D+TRI) f32
    ercat = c_ref[_ERCAT_R:_ERCAT_R + D, 0:2 * TRI]        # (D, 2T)   f32
    ecat = c_ref[_ECAT_R:_ECAT_R + 2 * TRI, 0:D]           # (2T, D)   f32

    xc = data_ref[0:S, 0:2 * P]                            # (S, 2P)   f32
    z = data_ref[S:S + 1, 0:D]                             # (1, L)    f32

    # ---- fused bidirectional GRU; gate inputs hoisted out of the loop ----
    # gate-major fused layout [ r_L r_R | z_L z_R | n_L n_R ], each block = H.
    gi_all = (jnp.dot(xc.astype(bf16), w_in, preferred_element_type=f32)
              + b_in)                                      # (S, 6H)

    # h2 = [h_left | h_right]; both chains advance in lockstep (unrolled, S=8).
    h2 = jnp.zeros((1, 2 * H), f32)
    for t in range(S):
        gi = gi_all[t:t + 1, :]                            # (1, 6H) static row
        gh = jnp.dot(h2.astype(bf16), whh, preferred_element_type=f32) + bhh
        rz = jax.nn.sigmoid(gi[:, 0:4 * H] + gh[:, 0:4 * H])   # one 128-lane vreg
        r = rz[:, 0:2 * H]
        zg = rz[:, 2 * H:4 * H]
        n = jnp.tanh(gi[:, 4 * H:6 * H] + r * gh[:, 4 * H:6 * H])
        h2 = (1.0 - zg) * n + zg * h2

    # ---- gg-GRU over concat([z_old, h_left, h_right]); h0=0 => gh == b_hh ----
    zcat = jnp.concatenate([z, h2], axis=1)                # (1, L+2H)
    gi_g = (jnp.dot(zcat.astype(bf16), wg, preferred_element_type=f32)
            + bg_ih)                                       # (1, 3H)
    rz_g = jax.nn.sigmoid(gi_g[:, 0:2 * H] + bg_hh[:, 0:2 * H])
    r_g = rz_g[:, 0:H]
    z_g = rz_g[:, H:2 * H]
    n_g = jnp.tanh(gi_g[:, 2 * H:3 * H] + r_g * bg_hh[:, 2 * H:3 * H])
    h = (1.0 - z_g) * n_g                                  # + z_g * 0

    # ---- MLP head: single fused [mean | log-var] matmul ----
    h1 = jnp.maximum(
        jnp.dot(h.astype(bf16), wi, preferred_element_type=f32) + bi, 0.0)
    head = (jnp.dot(h1.astype(bf16), whead, preferred_element_type=f32)
            + bhead)                                       # (1, D+TRI)
    mean = head[:, 0:D]
    lv = head[:, D:D + TRI]                                # (1, TRI)

    # ---- symmetric triu scatter: ONE fused selection matmul ----
    # m = (ER*lv) @ ECt + (ECm*lv) @ ERt  ==  ([ER|ECm] * [lv|lv]) @ [[ECt],[ERt]]
    lv2 = jnp.concatenate([lv, lv], axis=1)                # (1, 2*TRI)
    m = jnp.dot(ercat * lv2, ecat, preferred_element_type=f32)   # (D, D)

    # ---- torch.matrix_exp: scaling & squaring + degree-12 PS Taylor ----
    ri = lax.broadcasted_iota(jnp.int32, (D, D), 0)
    ci = lax.broadcasted_iota(jnp.int32, (D, D), 1)
    eye = (ri == ci).astype(f32)

    a = m * (1.0 / float(2 ** N_SQUARINGS))
    a2 = jnp.dot(a, a, preferred_element_type=f32)
    a34 = jnp.dot(a2, jnp.concatenate([a, a2], axis=1),
                  preferred_element_type=f32)              # (D, 2D): [a3 | a4]
    a3 = a34[:, 0:D]
    a4 = a34[:, D:2 * D]
    c = [1.0 / math.factorial(k) for k in range(TAYLOR_DEG + 1)]
    p0 = c[0] * eye + c[1] * a + c[2] * a2 + c[3] * a3
    p1 = c[4] * eye + c[5] * a + c[6] * a2 + c[7] * a3
    p2 = c[8] * eye + c[9] * a + c[10] * a2 + c[11] * a3
    # T = ((c12*A4 + P2) @ A4 + P1) @ A4 + P0   (degree-12 Taylor of exp(A))
    t1 = jnp.dot(c[12] * a4 + p2, a4, preferred_element_type=f32) + p1
    expa = jnp.dot(t1, a4, preferred_element_type=f32) + p0
    for _ in range(N_SQUARINGS):
        # (default matmul precision was validated at the test tolerance; with
        #  only 3 squarings the error amplification is smaller than before)
        expa = jnp.dot(expa, expa, preferred_element_type=f32)

    # ---- single lane-dense (8,128) output slab: one unmasked store ----
    mean8 = jnp.broadcast_to(mean, (D, D))
    pad = jnp.zeros((D, 128 - 2 * D), f32)
    out_ref[...] = jnp.concatenate([expa, mean8, pad], axis=1)


# --------------------------- wrapper / glue ---------------------------
@jax.jit
def inference_model_forward(x_left_right, z_old, w_slab, c_slab):
    S, L = SEQ_LEN, LATENT
    x_left = x_left_right[0:S]
    x_right_rev = x_left_right[S:2 * S][::-1]
    # xc[t] = [x_right_rev[t] | x_left[t]] so one matmul yields both GRUs' gate inputs
    xc = jnp.concatenate([x_right_rev, x_left], axis=1)            # (S, 2P)
    width = max(2 * P, L)
    xc = jnp.pad(xc, ((0, 0), (0, width - 2 * P)))
    zp = jnp.pad(z_old, ((0, 0), (0, width - L)))
    data = jnp.concatenate([xc, zp], axis=0)                       # (S+1, width)

    out = pl.pallas_call(
        _inference_kernel,
        out_shape=jax.ShapeDtypeStruct((L, 128), jnp.float32),
        in_specs=[pl.BlockSpec(memory_space=pltpu.MemorySpace.VMEM)] * 3,
        out_specs=pl.BlockSpec(memory_space=pltpu.MemorySpace.VMEM),
    )(data, w_slab, c_slab)

    var = out[:, 0:L]
    mean = out[0:1, L:2 * L]
    # MLP.forward returns samples=None; reparametrization is never called.
    return None, mean, var


def init_params(key):
    """Deterministic init, PyTorch-style U(-1/sqrt(H), 1/sqrt(H)). Weights are
    stored transposed (in_dim, out_dim); biases are (1, out_dim)."""
    ks = iter(jax.random.split(key, 32))
    H, L, T = HIDDEN, LATENT, TRI

    def unif(k, shape, fan):
        b = 1.0 / np.sqrt(fan)
        return jax.random.uniform(k, shape, jnp.float32, -b, b)

    params = {}

    def gru_params(prefix, in_dim):
        params[prefix + '_w_ih'] = unif(next(ks), (in_dim, 3 * H), H)
        params[prefix + '_w_hh'] = unif(next(ks), (H, 3 * H), H)
        params[prefix + '_b_ih'] = unif(next(ks), (1, 3 * H), H)
        params[prefix + '_b_hh'] = unif(next(ks), (1, 3 * H), H)

    gru_params('gl', P)               # gru_left
    gru_params('gr', P)               # gru_right
    gru_params('gg', L + 2 * H)       # gru
    params['mlp_wi'] = unif(next(ks), (H, H), H)
    params['mlp_bi'] = unif(next(ks), (1, H), H)
    params['mlp_wm'] = unif(next(ks), (H, L), H)
    params['mlp_bm'] = unif(next(ks), (1, L), H)
    params['mlp_wv'] = unif(next(ks), (H, T), H)
    params['mlp_bv'] = unif(next(ks), (1, T), H)
    return params


def pack_kernel_params(params):
    """Pack all weights/biases/constants into two contiguous slabs:
       - w_slab (bf16): fused/gate-major MXU weights, 16-row-aligned blocks.
       - c_slab (f32):  biases + triu-scatter selection matrices.
    Host-side, one-time."""
    H, L, T = HIDDEN, LATENT, TRI

    def to_np(a):
        return np.asarray(a, np.float32)

    def gate_major_in(w, b, slot):
        """(in,3H),(1,3H) -> (in,6H),(1,6H): gate g goes to column block
        2*g + slot of the fused layout [r_L r_R | z_L z_R | n_L n_R]."""
        w, b = to_np(w), to_np(b)
        wg = np.zeros((w.shape[0], 6 * H), np.float32)
        bg = np.zeros((1, 6 * H), np.float32)
        for g in range(3):
            c0 = (2 * g + slot) * H
            wg[:, c0:c0 + H] = w[:, g * H:(g + 1) * H]
            bg[:, c0:c0 + H] = b[:, g * H:(g + 1) * H]
        return wg, bg

    wl_gm, bl_gm = gate_major_in(params['gl_w_ih'], params['gl_b_ih'], 0)
    wr_gm, br_gm = gate_major_in(params['gr_w_ih'], params['gr_b_ih'], 1)
    # stacked input weight: rows 0:P act on x_right_rev, rows P:2P on x_left
    w_in = np.concatenate([wl_gm, wr_gm], axis=0)                  # (2P, 6H)

    # fused block-diagonal hidden->hidden weight; rows = [h_left | h_right]
    whh = np.zeros((2 * H, 6 * H), np.float32)
    bhh = np.zeros((1, 6 * H), np.float32)
    wl_hh, wr_hh = to_np(params['gl_w_hh']), to_np(params['gr_w_hh'])
    bl_hh, br_hh = to_np(params['gl_b_hh']), to_np(params['gr_b_hh'])
    for g in range(3):
        whh[0:H, (2 * g) * H:(2 * g + 1) * H] = wl_hh[:, g * H:(g + 1) * H]
        whh[H:2 * H, (2 * g + 1) * H:(2 * g + 2) * H] = wr_hh[:, g * H:(g + 1) * H]
        bhh[:, (2 * g) * H:(2 * g + 1) * H] = bl_hh[:, g * H:(g + 1) * H]
        bhh[:, (2 * g + 1) * H:(2 * g + 2) * H] = br_hh[:, g * H:(g + 1) * H]

    wg_ih = to_np(params['gg_w_ih'])        # (L+2H, 3H); rows = [z | h_L | h_R]
    w_head = np.concatenate([to_np(params['mlp_wm']), to_np(params['mlp_wv'])],
                            axis=1)         # (H, L+T)
    b_head = np.concatenate([to_np(params['mlp_bm']), to_np(params['mlp_bv'])],
                            axis=1)         # (1, L+T)

    # --- bf16 weight slab ---
    w_slab = np.zeros((_W_ROWS, 6 * H), np.float32)
    w_slab[_W_IN_R:_W_IN_R + 2 * P, :] = w_in
    w_slab[_WHH_R:_WHH_R + 2 * H, :] = whh
    w_slab[_WG_R:_WG_R + L + 2 * H, 0:3 * H] = wg_ih
    w_slab[_WI_R:_WI_R + H, 0:H] = to_np(params['mlp_wi'])
    w_slab[_WHEAD_R:_WHEAD_R + H, 0:L + T] = w_head

    # --- f32 constant slab (biases + selection matrices) ---
    # selection matrices: for lv in row-major triu order (torch.triu_indices),
    # m = (ER*lv) @ ECt + (ECm*lv) @ ERt is the symmetric scatter.
    er = np.zeros((L, T), np.float32)
    ect = np.zeros((T, L), np.float32)
    ecm = np.zeros((L, T), np.float32)
    ert = np.zeros((T, L), np.float32)
    k = 0
    for i in range(L):
        for j in range(i, L):
            er[i, k] = 1.0
            ect[k, j] = 1.0
            ert[k, i] = 1.0
            if i != j:
                ecm[j, k] = 1.0
            k += 1
    ercat = np.concatenate([er, ecm], axis=1)       # (L, 2T)
    ecat = np.concatenate([ect, ert], axis=0)       # (2T, L)

    c_slab = np.zeros((_C_ROWS, 6 * H), np.float32)
    c_slab[0, :] = (bl_gm + br_gm)[0]
    c_slab[1, :] = bhh[0]
    c_slab[2, 0:3 * H] = to_np(params['gg_b_ih'])[0]
    c_slab[3, 0:3 * H] = to_np(params['gg_b_hh'])[0]
    c_slab[4, 0:H] = to_np(params['mlp_bi'])[0]
    c_slab[5, 0:L + T] = b_head[0]
    c_slab[_ERCAT_R:_ERCAT_R + L, 0:2 * T] = ercat
    c_slab[_ECAT_R:_ECAT_R + 2 * T, 0:L] = ecat

    return jnp.asarray(w_slab, jnp.bfloat16), jnp.asarray(c_slab, jnp.float32)


# --------------------------- pure-JAX reference ---------------------------
def _gru_seq_ref(xs, w_ih, w_hh, b_ih, b_hh):
    H = w_hh.shape[0]
    h = jnp.zeros((1, H), jnp.float32)
    for t in range(xs.shape[0]):
        x_t = xs[t:t + 1]
        gi = x_t @ w_ih + b_ih
        gh = h @ w_hh + b_hh
        r = jax.nn.sigmoid(gi[:, :H] + gh[:, :H])
        z = jax.nn.sigmoid(gi[:, H:2 * H] + gh[:, H:2 * H])
        n = jnp.tanh(gi[:, 2 * H:] + r * gh[:, 2 * H:])
        h = (1.0 - z) * n + z * h
    return h


def ref_forward(x, z_old, params):
    x_left, x_right = x[:SEQ_LEN], x[SEQ_LEN:]
    x_right_rev = x_right[::-1]
    h_left = _gru_seq_ref(x_right_rev, params['gl_w_ih'], params['gl_w_hh'],
                          params['gl_b_ih'], params['gl_b_hh'])
    h_right = _gru_seq_ref(x_left, params['gr_w_ih'], params['gr_w_hh'],
                           params['gr_b_ih'], params['gr_b_hh'])
    cat = jnp.concatenate([z_old, h_left, h_right], axis=1)
    h = _gru_seq_ref(cat, params['gg_w_ih'], params['gg_w_hh'],
                     params['gg_b_ih'], params['gg_b_hh'])
    h1 = jax.nn.relu(h @ params['mlp_wi'] + params['mlp_bi'])
    mean = h1 @ params['mlp_wm'] + params['mlp_bm']
    lv = (h1 @ params['mlp_wv'] + params['mlp_bv'])[0]
    D = LATENT
    iu = np.triu_indices(D)
    m = jnp.zeros((D, D), jnp.float32)
    m = m.at[iu].set(lv)
    m = m.at[(iu[1], iu[0])].set(lv)
    var = jax.scipy.linalg.expm(m)
    return mean, var


# --------------------------- main ---------------------------
if __name__ == "__main__":
    key = jax.random.PRNGKey(0)
    kx, kz, kpkey = jax.random.split(key, 3)
    x_left_right = jax.random.normal(kx, (2 * SEQ_LEN, P), jnp.float32)
    z_old = jax.random.normal(kz, (1, LATENT), jnp.float32)
    params = init_params(kpkey)
    w_slab, c_slab = pack_kernel_params(params)

    samples, z_mean, z_var = inference_model_forward(x_left_right, z_old,
                                                     w_slab, c_slab)
    jax.block_until_ready((z_mean, z_var))

    # sanity check against a pure-JAX f32 reference (loose tol absorbs the
    # bf16 MXU-operand cast; review-approved at 5e-2)
    mean_ref, var_ref = ref_forward(x_left_right, z_old, params)
    assert samples is None
    assert np.allclose(np.asarray(z_mean), np.asarray(mean_ref), atol=5e-2, rtol=5e-2)
    assert np.allclose(np.asarray(z_var), np.asarray(var_ref), atol=5e-2, rtol=5e-2)

    print("KERNEL_OK")
</pallas_src>

<mosaic_0001>
module attributes {stable_mosaic.version = 11 : i64} {
  func.func @_inference_kernel(%arg0: memref<9x8xf32, #tpu.memory_space<vmem>>, %arg1: memref<224x192xbf16, #tpu.memory_space<vmem>>, %arg2: memref<88x192xf32, #tpu.memory_space<vmem>>, %arg3: memref<8x128xf32, #tpu.memory_space<vmem>>) attributes {dimension_semantics = [], scalar_prefetch = 0 : i64, scratch_operands = 0 : i64, tpu.core_type = #tpu.core_type<tc>} {
    %c0 = arith.constant 0 : index
    %c0_0 = arith.constant 0 : index
    %0 = vector.load %arg1[%c0, %c0_0] : memref<224x192xbf16, #tpu.memory_space<vmem>>, vector<8x192xbf16>
    %c16 = arith.constant 16 : index
    %c0_1 = arith.constant 0 : index
    %1 = vector.load %arg1[%c16, %c0_1] : memref<224x192xbf16, #tpu.memory_space<vmem>>, vector<64x192xbf16>
    %c80 = arith.constant 80 : index
    %c0_2 = arith.constant 0 : index
    %2 = vector.load %arg1[%c80, %c0_2] : memref<224x192xbf16, #tpu.memory_space<vmem>>, vector<72x96xbf16>
    %c160 = arith.constant 160 : index
    %c0_3 = arith.constant 0 : index
    %3 = vector.load %arg1[%c160, %c0_3] : memref<224x192xbf16, #tpu.memory_space<vmem>>, vector<32x32xbf16>
    %c192 = arith.constant 192 : index
    %c0_4 = arith.constant 0 : index
    %4 = vector.load %arg1[%c192, %c0_4] : memref<224x192xbf16, #tpu.memory_space<vmem>>, vector<32x44xbf16>
    %c0_5 = arith.constant 0 : index
    %c0_6 = arith.constant 0 : index
    %5 = vector.load %arg2[%c0_5, %c0_6] : memref<88x192xf32, #tpu.memory_space<vmem>>, vector<1x192xf32>
    %c1 = arith.constant 1 : index
    %c0_7 = arith.constant 0 : index
    %6 = vector.load %arg2[%c1, %c0_7] : memref<88x192xf32, #tpu.memory_space<vmem>>, vector<1x192xf32>
    %c2 = arith.constant 2 : index
    %c0_8 = arith.constant 0 : index
    %7 = vector.load %arg2[%c2, %c0_8] : memref<88x192xf32, #tpu.memory_space<vmem>>, vector<1x96xf32>
    %c3 = arith.constant 3 : index
    %c0_9 = arith.constant 0 : index
    %8 = vector.load %arg2[%c3, %c0_9] : memref<88x192xf32, #tpu.memory_space<vmem>>, vector<1x96xf32>
    %c4 = arith.constant 4 : index
    %c0_10 = arith.constant 0 : index
    %9 = vector.load %arg2[%c4, %c0_10] : memref<88x192xf32, #tpu.memory_space<vmem>>, vector<1x32xf32>
    %c5 = arith.constant 5 : index
    %c0_11 = arith.constant 0 : index
    %10 = vector.load %arg2[%c5, %c0_11] : memref<88x192xf32, #tpu.memory_space<vmem>>, vector<1x44xf32>
    %c8 = arith.constant 8 : index
    %c0_12 = arith.constant 0 : index
    %11 = vector.load %arg2[%c8, %c0_12] : memref<88x192xf32, #tpu.memory_space<vmem>>, vector<8x72xf32>
    %c16_13 = arith.constant 16 : index
    %c0_14 = arith.constant 0 : index
    %12 = vector.load %arg2[%c16_13, %c0_14] : memref<88x192xf32, #tpu.memory_space<vmem>>, vector<72x8xf32>
    %c0_15 = arith.constant 0 : index
    %c0_16 = arith.constant 0 : index
    %13 = vector.load %arg0[%c0_15, %c0_16] : memref<9x8xf32, #tpu.memory_space<vmem>>, vector<8x8xf32>
    %c8_17 = arith.constant 8 : index
    %c0_18 = arith.constant 0 : index
    %14 = vector.load %arg0[%c8_17, %c0_18] : memref<9x8xf32, #tpu.memory_space<vmem>>, vector<1x8xf32>
    %15 = arith.truncf %13 : vector<8x8xf32> to vector<8x8xbf16>
    %cst = arith.constant dense<0.000000e+00> : vector<8x192xf32>
    %16 = tpu.matmul %15, %0, %cst {dimension_numbers = #tpu.dot_dimension_numbers<[1], [0], [0], [1], [0, 0, 1, 1], [], []>} : vector<8x8xbf16>, vector<8x192xbf16>, vector<8x192xf32> -> vector<8x192xf32>
    %17 = vector.broadcast %5 : vector<1x192xf32> to vector<8x192xf32>
    %18 = arith.addf %16, %17 : vector<8x192xf32>
    %cst_19 = arith.constant 0.000000e+00 : f32
    %19 = vector.broadcast %cst_19 : f32 to vector<1x64xf32>
    %20 = vector.extract_strided_slice %18 {offsets = [0, 0], sizes = [1, 192], strides = [1, 1]} : vector<8x192xf32> to vector<1x192xf32>
    %21 = arith.truncf %19 : vector<1x64xf32> to vector<1x64xbf16>
    %cst_20 = arith.constant dense<0.000000e+00> : vector<1x192xf32>
    %22 = tpu.matmul %21, %1, %cst_20 {dimension_numbers = #tpu.dot_dimension_numbers<[1], [0], [0], [1], [0, 0, 1, 1], [], []>} : vector<1x64xbf16>, vector<64x192xbf16>, vector<1x192xf32> -> vector<1x192xf32>
    %23 = arith.addf %22, %6 : vector<1x192xf32>
    %24 = vector.extract_strided_slice %20 {offsets = [0, 0], sizes = [1, 128], strides = [1, 1]} : vector<1x192xf32> to vector<1x128xf32>
    %25 = vector.extract_strided_slice %23 {offsets = [0, 0], sizes = [1, 128], strides = [1, 1]} : vector<1x192xf32> to vector<1x128xf32>
    %26 = arith.addf %24, %25 : vector<1x128xf32>
    %27 = arith.negf %26 : vector<1x128xf32>
    %28 = math.exp %27 : vector<1x128xf32>
    %cst_21 = arith.constant 1.000000e+00 : f32
    %29 = vector.broadcast %cst_21 : f32 to vector<1x128xf32>
    %30 = arith.addf %29, %28 : vector<1x128xf32>
    %31 = arith.divf %29, %30 : vector<1x128xf32>
    %32 = vector.extract_strided_slice %31 {offsets = [0, 0], sizes = [1, 64], strides = [1, 1]} : vector<1x128xf32> to vector<1x64xf32>
    %33 = vector.extract_strided_slice %31 {offsets = [0, 64], sizes = [1, 64], strides = [1, 1]} : vector<1x128xf32> to vector<1x64xf32>
    %34 = vector.extract_strided_slice %20 {offsets = [0, 128], sizes = [1, 64], strides = [1, 1]} : vector<1x192xf32> to vector<1x64xf32>
    %35 = vector.extract_strided_slice %23 {offsets = [0, 128], sizes = [1, 64], strides = [1, 1]} : vector<1x192xf32> to vector<1x64xf32>
    %36 = arith.mulf %32, %35 : vector<1x64xf32>
    %37 = arith.addf %34, %36 : vector<1x64xf32>
    %38 = math.tanh %37 : vector<1x64xf32>
    %cst_22 = arith.constant 1.000000e+00 : f32
    %39 = vector.broadcast %cst_22 : f32 to vector<1x64xf32>
    %40 = arith.subf %39, %33 : vector<1x64xf32>
    %41 = arith.mulf %40, %38 : vector<1x64xf32>
    %42 = arith.mulf %33, %19 : vector<1x64xf32>
    %43 = arith.addf %41, %42 : vector<1x64xf32>
    %44 = vector.extract_strided_slice %18 {offsets = [1, 0], sizes = [1, 192], strides = [1, 1]} : vector<8x192xf32> to vector<1x192xf32>
    %45 = arith.truncf %43 : vector<1x64xf32> to vector<1x64xbf16>
    %cst_23 = arith.constant dense<0.000000e+00> : vector<1x192xf32>
    %46 = tpu.matmul %45, %1, %cst_23 {dimension_numbers = #tpu.dot_dimension_numbers<[1], [0], [0], [1], [0, 0, 1, 1], [], []>} : vector<1x64xbf16>, vector<64x192xbf16>, vector<1x192xf32> -> vector<1x192xf32>
    %47 = arith.addf %46, %6 : vector<1x192xf32>
    %48 = vector.extract_strided_slice %44 {offsets = [0, 0], sizes = [1, 128], strides = [1, 1]} : vector<1x192xf32> to vector<1x128xf32>
    %49 = vector.extract_strided_slice %47 {offsets = [0, 0], sizes = [1, 128], strides = [1, 1]} : vector<1x192xf32> to vector<1x128xf32>
    %50 = arith.addf %48, %49 : vector<1x128xf32>
    %51 = arith.negf %50 : vector<1x128xf32>
    %52 = math.exp %51 : vector<1x128xf32>
    %cst_24 = arith.constant 1.000000e+00 : f32
    %53 = vector.broadcast %cst_24 : f32 to vector<1x128xf32>
    %54 = arith.addf %53, %52 : vector<1x128xf32>
    %55 = arith.divf %53, %54 : vector<1x128xf32>
    %56 = vector.extract_strided_slice %55 {offsets = [0, 0], sizes = [1, 64], strides = [1, 1]} : vector<1x128xf32> to vector<1x64xf32>
    %57 = vector.extract_strided_slice %55 {offsets = [0, 64], sizes = [1, 64], strides = [1, 1]} : vector<1x128xf32> to vector<1x64xf32>
    %58 = vector.extract_strided_slice %44 {offsets = [0, 128], sizes = [1, 64], strides = [1, 1]} : vector<1x192xf32> to vector<1x64xf32>
    %59 = vector.extract_strided_slice %47 {offsets = [0, 128], sizes = [1, 64], strides = [1, 1]} : vector<1x192xf32> to vector<1x64xf32>
    %60 = arith.mulf %56, %59 : vector<1x64xf32>
    %61 = arith.addf %58, %60 : vector<1x64xf32>
    %62 = math.tanh %61 : vector<1x64xf32>
    %cst_25 = arith.constant 1.000000e+00 : f32
    %63 = vector.broadcast %cst_25 : f32 to vector<1x64xf32>
    %64 = arith.subf %63, %57 : vector<1x64xf32>
    %65 = arith.mulf %64, %62 : vector<1x64xf32>
    %66 = arith.mulf %57, %43 : vector<1x64xf32>
    %67 = arith.addf %65, %66 : vector<1x64xf32>
    %68 = vector.extract_strided_slice %18 {offsets = [2, 0], sizes = [1, 192], strides = [1, 1]} : vector<8x192xf32> to vector<1x192xf32>
    %69 = arith.truncf %67 : vector<1x64xf32> to vector<1x64xbf16>
    %cst_26 = arith.constant dense<0.000000e+00> : vector<1x192xf32>
    %70 = tpu.matmul %69, %1, %cst_26 {dimension_numbers = #tpu.dot_dimension_numbers<[1], [0], [0], [1], [0, 0, 1, 1], [], []>} : vector<1x64xbf16>, vector<64x192xbf16>, vector<1x192xf32> -> vector<1x192xf32>
    %71 = arith.addf %70, %6 : vector<1x192xf32>
    %72 = vector.extract_strided_slice %68 {offsets = [0, 0], sizes = [1, 128], strides = [1, 1]} : vector<1x192xf32> to vector<1x128xf32>
    %73 = vector.extract_strided_slice %71 {offsets = [0, 0], sizes = [1, 128], strides = [1, 1]} : vector<1x192xf32> to vector<1x128xf32>
    %74 = arith.addf %72, %73 : vector<1x128xf32>
    %75 = arith.negf %74 : vector<1x128xf32>
    %76 = math.exp %75 : vector<1x128xf32>
    %cst_27 = arith.constant 1.000000e+00 : f32
    %77 = vector.broadcast %cst_27 : f32 to vector<1x128xf32>
    %78 = arith.addf %77, %76 : vector<1x128xf32>
    %79 = arith.divf %77, %78 : vector<1x128xf32>
    %80 = vector.extract_strided_slice %79 {offsets = [0, 0], sizes = [1, 64], strides = [1, 1]} : vector<1x128xf32> to vector<1x64xf32>
    %81 = vector.extract_strided_slice %79 {offsets = [0, 64], sizes = [1, 64], strides = [1, 1]} : vector<1x128xf32> to vector<1x64xf32>
    %82 = vector.extract_strided_slice %68 {offsets = [0, 128], sizes = [1, 64], strides = [1, 1]} : vector<1x192xf32> to vector<1x64xf32>
    %83 = vector.extract_strided_slice %71 {offsets = [0, 128], sizes = [1, 64], strides = [1, 1]} : vector<1x192xf32> to vector<1x64xf32>
    %84 = arith.mulf %80, %83 : vector<1x64xf32>
    %85 = arith.addf %82, %84 : vector<1x64xf32>
    %86 = math.tanh %85 : vector<1x64xf32>
    %cst_28 = arith.constant 1.000000e+00 : f32
    %87 = vector.broadcast %cst_28 : f32 to vector<1x64xf32>
    %88 = arith.subf %87, %81 : vector<1x64xf32>
    %89 = arith.mulf %88, %86 : vector<1x64xf32>
    %90 = arith.mulf %81, %67 : vector<1x64xf32>
    %91 = arith.addf %89, %90 : vector<1x64xf32>
    %92 = vector.extract_strided_slice %18 {offsets = [3, 0], sizes = [1, 192], strides = [1, 1]} : vector<8x192xf32> to vector<1x192xf32>
    %93 = arith.truncf %91 : vector<1x64xf32> to vector<1x64xbf16>
    %cst_29 = arith.constant dense<0.000000e+00> : vector<1x192xf32>
    %94 = tpu.matmul %93, %1, %cst_29 {dimension_numbers = #tpu.dot_dimension_numbers<[1], [0], [0], [1], [0, 0, 1, 1], [], []>} : vector<1x64xbf16>, vector<64x192xbf16>, vector<1x192xf32> -> vector<1x192xf32>
    %95 = arith.addf %94, %6 : vector<1x192xf32>
    %96 = vector.extract_strided_slice %92 {offsets = [0, 0], sizes = [1, 128], strides = [1, 1]} : vector<1x192xf32> to vector<1x128xf32>
    %97 = vector.extract_strided_slice %95 {offsets = [0, 0], sizes = [1, 128], strides = [1, 1]} : vector<1x192xf32> to vector<1x128xf32>
    %98 = arith.addf %96, %97 : vector<1x128xf32>
    %99 = arith.negf %98 : vector<1x128xf32>
    %100 = math.exp %99 : vector<1x128xf32>
    %cst_30 = arith.constant 1.000000e+00 : f32
    %101 = vector.broadcast %cst_30 : f32 to vector<1x128xf32>
    %102 = arith.addf %101, %100 : vector<1x128xf32>
    %103 = arith.divf %101, %102 : vector<1x128xf32>
    %104 = vector.extract_strided_slice %103 {offsets = [0, 0], sizes = [1, 64], strides = [1, 1]} : vector<1x128xf32> to vector<1x64xf32>
    %105 = vector.extract_strided_slice %103 {offsets = [0, 64], sizes = [1, 64], strides = [1, 1]} : vector<1x128xf32> to vector<1x64xf32>
    %106 = vector.extract_strided_slice %92 {offsets = [0, 128], sizes = [1, 64], strides = [1, 1]} : vector<1x192xf32> to vector<1x64xf32>
    %107 = vector.extract_strided_slice %95 {offsets = [0, 128], sizes = [1, 64], strides = [1, 1]} : vector<1x192xf32> to vector<1x64xf32>
    %108 = arith.mulf %104, %107 : vector<1x64xf32>
    %109 = arith.addf %106, %108 : vector<1x64xf32>
    %110 = math.tanh %109 : vector<1x64xf32>
    %cst_31 = arith.constant 1.000000e+00 : f32
    %111 = vector.broadcast %cst_31 : f32 to vector<1x64xf32>
    %112 = arith.subf %111, %105 : vector<1x64xf32>
    %113 = arith.mulf %112, %110 : vector<1x64xf32>
    %114 = arith.mulf %105, %91 : vector<1x64xf32>
    %115 = arith.addf %113, %114 : vector<1x64xf32>
    %116 = vector.extract_strided_slice %18 {offsets = [4, 0], sizes = [1, 192], strides = [1, 1]} : vector<8x192xf32> to vector<1x192xf32>
    %117 = arith.truncf %115 : vector<1x64xf32> to vector<1x64xbf16>
    %cst_32 = arith.constant dense<0.000000e+00> : vector<1x192xf32>
    %118 = tpu.matmul %117, %1, %cst_32 {dimension_numbers = #tpu.dot_dimension_numbers<[1], [0], [0], [1], [0, 0, 1, 1], [], []>} : vector<1x64xbf16>, vector<64x192xbf16>, vector<1x192xf32> -> vector<1x192xf32>
    %119 = arith.addf %118, %6 : vector<1x192xf32>
    %120 = vector.extract_strided_slice %116 {offsets = [0, 0], sizes = [1, 128], strides = [1, 1]} : vector<1x192xf32> to vector<1x128xf32>
    %121 = vector.extract_strided_slice %119 {offsets = [0, 0], sizes = [1, 128], strides = [1, 1]} : vector<1x192xf32> to vector<1x128xf32>
    %122 = arith.addf %120, %121 : vector<1x128xf32>
    %123 = arith.negf %122 : vector<1x128xf32>
    %124 = math.exp %123 : vector<1x128xf32>
    %cst_33 = arith.constant 1.000000e+00 : f32
    %125 = vector.broadcast %cst_33 : f32 to vector<1x128xf32>
    %126 = arith.addf %125, %124 : vector<1x128xf32>
    %127 = arith.divf %125, %126 : vector<1x128xf32>
    %128 = vector.extract_strided_slice %127 {offsets = [0, 0], sizes = [1, 64], strides = [1, 1]} : vector<1x128xf32> to vector<1x64xf32>
    %129 = vector.extract_strided_slice %127 {offsets = [0, 64], sizes = [1, 64], strides = [1, 1]} : vector<1x128xf32> to vector<1x64xf32>
    %130 = vector.extract_strided_slice %116 {offsets = [0, 128], sizes = [1, 64], strides = [1, 1]} : vector<1x192xf32> to vector<1x64xf32>
    %131 = vector.extract_strided_slice %119 {offsets = [0, 128], sizes = [1, 64], strides = [1, 1]} : vector<1x192xf32> to vector<1x64xf32>
    %132 = arith.mulf %128, %131 : vector<1x64xf32>
    %133 = arith.addf %130, %132 : vector<1x64xf32>
    %134 = math.tanh %133 : vector<1x64xf32>
    %cst_34 = arith.constant 1.000000e+00 : f32
    %135 = vector.broadcast %cst_34 : f32 to vector<1x64xf32>
    %136 = arith.subf %135, %129 : vector<1x64xf32>
    %137 = arith.mulf %136, %134 : vector<1x64xf32>
    %138 = arith.mulf %129, %115 : vector<1x64xf32>
    %139 = arith.addf %137, %138 : vector<1x64xf32>
    %140 = vector.extract_strided_slice %18 {offsets = [5, 0], sizes = [1, 192], strides = [1, 1]} : vector<8x192xf32> to vector<1x192xf32>
    %141 = arith.truncf %139 : vector<1x64xf32> to vector<1x64xbf16>
    %cst_35 = arith.constant dense<0.000000e+00> : vector<1x192xf32>
    %142 = tpu.matmul %141, %1, %cst_35 {dimension_numbers = #tpu.dot_dimension_numbers<[1], [0], [0], [1], [0, 0, 1, 1], [], []>} : vector<1x64xbf16>, vector<64x192xbf16>, vector<1x192xf32> -> vector<1x192xf32>
    %143 = arith.addf %142, %6 : vector<1x192xf32>
    %144 = vector.extract_strided_slice %140 {offsets = [0, 0], sizes = [1, 128], strides = [1, 1]} : vector<1x192xf32> to vector<1x128xf32>
    %145 = vector.extract_strided_slice %143 {offsets = [0, 0], sizes = [1, 128], strides = [1, 1]} : vector<1x192xf32> to vector<1x128xf32>
    %146 = arith.addf %144, %145 : vector<1x128xf32>
    %147 = arith.negf %146 : vector<1x128xf32>
    %148 = math.exp %147 : vector<1x128xf32>
    %cst_36 = arith.constant 1.000000e+00 : f32
    %149 = vector.broadcast %cst_36 : f32 to vector<1x128xf32>
    %150 = arith.addf %149, %148 : vector<1x128xf32>
    %151 = arith.divf %149, %150 : vector<1x128xf32>
    %152 = vector.extract_strided_slice %151 {offsets = [0, 0], sizes = [1, 64], strides = [1, 1]} : vector<1x128xf32> to vector<1x64xf32>
    %153 = vector.extract_strided_slice %151 {offsets = [0, 64], sizes = [1, 64], strides = [1, 1]} : vector<1x128xf32> to vector<1x64xf32>
    %154 = vector.extract_strided_slice %140 {offsets = [0, 128], sizes = [1, 64], strides = [1, 1]} : vector<1x192xf32> to vector<1x64xf32>
    %155 = vector.extract_strided_slice %143 {offsets = [0, 128], sizes = [1, 64], strides = [1, 1]} : vector<1x192xf32> to vector<1x64xf32>
    %156 = arith.mulf %152, %155 : vector<1x64xf32>
    %157 = arith.addf %154, %156 : vector<1x64xf32>
    %158 = math.tanh %157 : vector<1x64xf32>
    %cst_37 = arith.constant 1.000000e+00 : f32
    %159 = vector.broadcast %cst_37 : f32 to vector<1x64xf32>
    %160 = arith.subf %159, %153 : vector<1x64xf32>
    %161 = arith.mulf %160, %158 : vector<1x64xf32>
    %162 = arith.mulf %153, %139 : vector<1x64xf32>
    %163 = arith.addf %161, %162 : vector<1x64xf32>
    %164 = vector.extract_strided_slice %18 {offsets = [6, 0], sizes = [1, 192], strides = [1, 1]} : vector<8x192xf32> to vector<1x192xf32>
    %165 = arith.truncf %163 : vector<1x64xf32> to vector<1x64xbf16>
    %cst_38 = arith.constant dense<0.000000e+00> : vector<1x192xf32>
    %166 = tpu.matmul %165, %1, %cst_38 {dimension_numbers = #tpu.dot_dimension_numbers<[1], [0], [0], [1], [0, 0, 1, 1], [], []>} : vector<1x64xbf16>, vector<64x192xbf16>, vector<1x192xf32> -> vector<1x192xf32>
    %167 = arith.addf %166, %6 : vector<1x192xf32>
    %168 = vector.extract_strided_slice %164 {offsets = [0, 0], sizes = [1, 128], strides = [1, 1]} : vector<1x192xf32> to vector<1x128xf32>
    %169 = vector.extract_strided_slice %167 {offsets = [0, 0], sizes = [1, 128], strides = [1, 1]} : vector<1x192xf32> to vector<1x128xf32>
    %170 = arith.addf %168, %169 : vector<1x128xf32>
    %171 = arith.negf %170 : vector<1x128xf32>
    %172 = math.exp %171 : vector<1x128xf32>
    %cst_39 = arith.constant 1.000000e+00 : f32
    %173 = vector.broadcast %cst_39 : f32 to vector<1x128xf32>
    %174 = arith.addf %173, %172 : vector<1x128xf32>
    %175 = arith.divf %173, %174 : vector<1x128xf32>
    %176 = vector.extract_strided_slice %175 {offsets = [0, 0], sizes = [1, 64], strides = [1, 1]} : vector<1x128xf32> to vector<1x64xf32>
    %177 = vector.extract_strided_slice %175 {offsets = [0, 64], sizes = [1, 64], strides = [1, 1]} : vector<1x128xf32> to vector<1x64xf32>
    %178 = vector.extract_strided_slice %164 {offsets = [0, 128], sizes = [1, 64], strides = [1, 1]} : vector<1x192xf32> to vector<1x64xf32>
    %179 = vector.extract_strided_slice %167 {offsets = [0, 128], sizes = [1, 64], strides = [1, 1]} : vector<1x192xf32> to vector<1x64xf32>
    %180 = arith.mulf %176, %179 : vector<1x64xf32>
    %181 = arith.addf %178, %180 : vector<1x64xf32>
    %182 = math.tanh %181 : vector<1x64xf32>
    %cst_40 = arith.constant 1.000000e+00 : f32
    %183 = vector.broadcast %cst_40 : f32 to vector<1x64xf32>
    %184 = arith.subf %183, %177 : vector<1x64xf32>
    %185 = arith.mulf %184, %182 : vector<1x64xf32>
    %186 = arith.mulf %177, %163 : vector<1x64xf32>
    %187 = arith.addf %185, %186 : vector<1x64xf32>
    %188 = vector.extract_strided_slice %18 {offsets = [7, 0], sizes = [1, 192], strides = [1, 1]} : vector<8x192xf32> to vector<1x192xf32>
    %189 = arith.truncf %187 : vector<1x64xf32> to vector<1x64xbf16>
    %cst_41 = arith.constant dense<0.000000e+00> : vector<1x192xf32>
    %190 = tpu.matmul %189, %1, %cst_41 {dimension_numbers = #tpu.dot_dimension_numbers<[1], [0], [0], [1], [0, 0, 1, 1], [], []>} : vector<1x64xbf16>, vector<64x192xbf16>, vector<1x192xf32> -> vector<1x192xf32>
    %191 = arith.addf %190, %6 : vector<1x192xf32>
    %192 = vector.extract_strided_slice %188 {offsets = [0, 0], sizes = [1, 128], strides = [1, 1]} : vector<1x192xf32> to vector<1x128xf32>
    %193 = vector.extract_strided_slice %191 {offsets = [0, 0], sizes = [1, 128], strides = [1, 1]} : vector<1x192xf32> to vector<1x128xf32>
    %194 = arith.addf %192, %193 : vector<1x128xf32>
    %195 = arith.negf %194 : vector<1x128xf32>
    %196 = math.exp %195 : vector<1x128xf32>
    %cst_42 = arith.constant 1.000000e+00 : f32
    %197 = vector.broadcast %cst_42 : f32 to vector<1x128xf32>
    %198 = arith.addf %197, %196 : vector<1x128xf32>
    %199 = arith.divf %197, %198 : vector<1x128xf32>
    %200 = vector.extract_strided_slice %199 {offsets = [0, 0], sizes = [1, 64], strides = [1, 1]} : vector<1x128xf32> to vector<1x64xf32>
    %201 = vector.extract_strided_slice %199 {offsets = [0, 64], sizes = [1, 64], strides = [1, 1]} : vector<1x128xf32> to vector<1x64xf32>
    %202 = vector.extract_strided_slice %188 {offsets = [0, 128], sizes = [1, 64], strides = [1, 1]} : vector<1x192xf32> to vector<1x64xf32>
    %203 = vector.extract_strided_slice %191 {offsets = [0, 128], sizes = [1, 64], strides = [1, 1]} : vector<1x192xf32> to vector<1x64xf32>
    %204 = arith.mulf %200, %203 : vector<1x64xf32>
    %205 = arith.addf %202, %204 : vector<1x64xf32>
    %206 = math.tanh %205 : vector<1x64xf32>
    %cst_43 = arith.constant 1.000000e+00 : f32
    %207 = vector.broadcast %cst_43 : f32 to vector<1x64xf32>
    %208 = arith.subf %207, %201 : vector<1x64xf32>
    %209 = arith.mulf %208, %206 : vector<1x64xf32>
    %210 = arith.mulf %201, %187 : vector<1x64xf32>
    %211 = arith.addf %209, %210 : vector<1x64xf32>
    %212 = tpu.concatenate %14, %211 in 1 : vector<1x8xf32>, vector<1x64xf32> -> vector<1x72xf32>
    %213 = arith.truncf %212 : vector<1x72xf32> to vector<1x72xbf16>
    %cst_44 = arith.constant dense<0.000000e+00> : vector<1x96xf32>
    %214 = tpu.matmul %213, %2, %cst_44 {dimension_numbers = #tpu.dot_dimension_numbers<[1], [0], [0], [1], [0, 0, 1, 1], [], []>} : vector<1x72xbf16>, vector<72x96xbf16>, vector<1x96xf32> -> vector<1x96xf32>
    %215 = arith.addf %214, %7 : vector<1x96xf32>
    %216 = vector.extract_strided_slice %215 {offsets = [0, 0], sizes = [1, 64], strides = [1, 1]} : vector<1x96xf32> to vector<1x64xf32>
    %217 = vector.extract_strided_slice %8 {offsets = [0, 0], sizes = [1, 64], strides = [1, 1]} : vector<1x96xf32> to vector<1x64xf32>
    %218 = arith.addf %216, %217 : vector<1x64xf32>
    %219 = arith.negf %218 : vector<1x64xf32>
    %220 = math.exp %219 : vector<1x64xf32>
    %cst_45 = arith.constant 1.000000e+00 : f32
    %221 = vector.broadcast %cst_45 : f32 to vector<1x64xf32>
    %222 = arith.addf %221, %220 : vector<1x64xf32>
    %223 = arith.divf %221, %222 : vector<1x64xf32>
    %224 = vector.extract_strided_slice %223 {offsets = [0, 0], sizes = [1, 32], strides = [1, 1]} : vector<1x64xf32> to vector<1x32xf32>
    %225 = vector.extract_strided_slice %223 {offsets = [0, 32], sizes = [1, 32], strides = [1, 1]} : vector<1x64xf32> to vector<1x32xf32>
    %226 = vector.extract_strided_slice %215 {offsets = [0, 64], sizes = [1, 32], strides = [1, 1]} : vector<1x96xf32> to vector<1x32xf32>
    %227 = vector.extract_strided_slice %8 {offsets = [0, 64], sizes = [1, 32], strides = [1, 1]} : vector<1x96xf32> to vector<1x32xf32>
    %228 = arith.mulf %224, %227 : vector<1x32xf32>
    %229 = arith.addf %226, %228 : vector<1x32xf32>
    %230 = math.tanh %229 : vector<1x32xf32>
    %cst_46 = arith.constant 1.000000e+00 : f32
    %231 = vector.broadcast %cst_46 : f32 to vector<1x32xf32>
    %232 = arith.subf %231, %225 : vector<1x32xf32>
    %233 = arith.mulf %232, %230 : vector<1x32xf32>
    %234 = arith.truncf %233 : vector<1x32xf32> to vector<1x32xbf16>
    %cst_47 = arith.constant dense<0.000000e+00> : vector<1x32xf32>
    %235 = tpu.matmul %234, %3, %cst_47 {dimension_numbers = #tpu.dot_dimension_numbers<[1], [0], [0], [1], [0, 0, 1, 1], [], []>} : vector<1x32xbf16>, vector<32x32xbf16>, vector<1x32xf32> -> vector<1x32xf32>
    %236 = arith.addf %235, %9 : vector<1x32xf32>
    %cst_48 = arith.constant 0.000000e+00 : f32
    %237 = vector.broadcast %cst_48 : f32 to vector<1x32xf32>
    %238 = arith.maximumf %236, %237 : vector<1x32xf32>
    %239 = arith.truncf %238 : vector<1x32xf32> to vector<1x32xbf16>
    %cst_49 = arith.constant dense<0.000000e+00> : vector<1x44xf32>
    %240 = tpu.matmul %239, %4, %cst_49 {dimension_numbers = #tpu.dot_dimension_numbers<[1], [0], [0], [1], [0, 0, 1, 1], [], []>} : vector<1x32xbf16>, vector<32x44xbf16>, vector<1x44xf32> -> vector<1x44xf32>
    %241 = arith.addf %240, %10 : vector<1x44xf32>
    %242 = vector.extract_strided_slice %241 {offsets = [0, 0], sizes = [1, 8], strides = [1, 1]} : vector<1x44xf32> to vector<1x8xf32>
    %243 = vector.extract_strided_slice %241 {offsets = [0, 8], sizes = [1, 36], strides = [1, 1]} : vector<1x44xf32> to vector<1x36xf32>
    %244 = tpu.concatenate %243, %243 in 1 : vector<1x36xf32>, vector<1x36xf32> -> vector<1x72xf32>
    %245 = vector.broadcast %244 : vector<1x72xf32> to vector<8x72xf32>
    %246 = arith.mulf %11, %245 : vector<8x72xf32>
    %cst_50 = arith.constant dense<0.000000e+00> : vector<8x8xf32>
    %247 = tpu.matmul %246, %12, %cst_50 {dimension_numbers = #tpu.dot_dimension_numbers<[1], [0], [0], [1], [0, 0, 1, 1], [], []>} : vector<8x72xf32>, vector<72x8xf32>, vector<8x8xf32> -> vector<8x8xf32>
    %248 = tpu.iota {dimensions = array<i32: 0>} : vector<8x8xi32>
    %249 = tpu.iota {dimensions = array<i32: 1>} : vector<8x8xi32>
    %250 = arith.cmpi eq, %248, %249 : vector<8x8xi32>
    %251 = arith.extui %250 : vector<8x8xi1> to vector<8x8xi32>
    %252 = arith.sitofp %251 : vector<8x8xi32> to vector<8x8xf32>
    %cst_51 = arith.constant 1.250000e-01 : f32
    %253 = vector.broadcast %cst_51 : f32 to vector<8x8xf32>
    %254 = arith.mulf %247, %253 : vector<8x8xf32>
    %cst_52 = arith.constant dense<0.000000e+00> : vector<8x8xf32>
    %255 = tpu.matmul %254, %254, %cst_52 {dimension_numbers = #tpu.dot_dimension_numbers<[1], [0], [0], [1], [0, 0, 1, 1], [], []>} : vector<8x8xf32>, vector<8x8xf32>, vector<8x8xf32> -> vector<8x8xf32>
    %256 = tpu.concatenate %254, %255 in 1 : vector<8x8xf32>, vector<8x8xf32> -> vector<8x16xf32>
    %cst_53 = arith.constant dense<0.000000e+00> : vector<8x16xf32>
    %257 = tpu.matmul %255, %256, %cst_53 {dimension_numbers = #tpu.dot_dimension_numbers<[1], [0], [0], [1], [0, 0, 1, 1], [], []>} : vector<8x8xf32>, vector<8x16xf32>, vector<8x16xf32> -> vector<8x16xf32>
    %258 = vector.extract_strided_slice %257 {offsets = [0, 0], sizes = [8, 8], strides = [1, 1]} : vector<8x16xf32> to vector<8x8xf32>
    %259 = vector.extract_strided_slice %257 {offsets = [0, 8], sizes = [8, 8], strides = [1, 1]} : vector<8x16xf32> to vector<8x8xf32>
    %cst_54 = arith.constant 1.000000e+00 : f32
    %260 = vector.broadcast %cst_54 : f32 to vector<8x8xf32>
    %261 = arith.mulf %260, %252 : vector<8x8xf32>
    %cst_55 = arith.constant 1.000000e+00 : f32
    %262 = vector.broadcast %cst_55 : f32 to vector<8x8xf32>
    %263 = arith.mulf %262, %254 : vector<8x8xf32>
    %264 = arith.addf %261, %263 : vector<8x8xf32>
    %cst_56 = arith.constant 5.000000e-01 : f32
    %265 = vector.broadcast %cst_56 : f32 to vector<8x8xf32>
    %266 = arith.mulf %265, %255 : vector<8x8xf32>
    %267 = arith.addf %264, %266 : vector<8x8xf32>
    %cst_57 = arith.constant 0.166666672 : f32
    %268 = vector.broadcast %cst_57 : f32 to vector<8x8xf32>
    %269 = arith.mulf %268, %258 : vector<8x8xf32>
    %270 = arith.addf %267, %269 : vector<8x8xf32>
    %cst_58 = arith.constant 0.0416666679 : f32
    %271 = vector.broadcast %cst_58 : f32 to vector<8x8xf32>
    %272 = arith.mulf %271, %252 : vector<8x8xf32>
    %cst_59 = arith.constant 0.00833333377 : f32
    %273 = vector.broadcast %cst_59 : f32 to vector<8x8xf32>
    %274 = arith.mulf %273, %254 : vector<8x8xf32>
    %275 = arith.addf %272, %274 : vector<8x8xf32>
    %cst_60 = arith.constant 0.00138888892 : f32
    %276 = vector.broadcast %cst_60 : f32 to vector<8x8xf32>
    %277 = arith.mulf %276, %255 : vector<8x8xf32>
    %278 = arith.addf %275, %277 : vector<8x8xf32>
    %cst_61 = arith.constant 1.98412701E-4 : f32
    %279 = vector.broadcast %cst_61 : f32 to vector<8x8xf32>
    %280 = arith.mulf %279, %258 : vector<8x8xf32>
    %281 = arith.addf %278, %280 : vector<8x8xf32>
    %cst_62 = arith.constant 2.48015876E-5 : f32
    %282 = vector.broadcast %cst_62 : f32 to vector<8x8xf32>
    %283 = arith.mulf %282, %252 : vector<8x8xf32>
    %cst_63 = arith.constant 2.75573188E-6 : f32
    %284 = vector.broadcast %cst_63 : f32 to vector<8x8xf32>
    %285 = arith.mulf %284, %254 : vector<8x8xf32>
    %286 = arith.addf %283, %285 : vector<8x8xf32>
    %cst_64 = arith.constant 2.755732E-7 : f32
    %287 = vector.broadcast %cst_64 : f32 to vector<8x8xf32>
    %288 = arith.mulf %287, %255 : vector<8x8xf32>
    %289 = arith.addf %286, %288 : vector<8x8xf32>
    %cst_65 = arith.constant 2.50521079E-8 : f32
    %290 = vector.broadcast %cst_65 : f32 to vector<8x8xf32>
    %291 = arith.mulf %290, %258 : vector<8x8xf32>
    %292 = arith.addf %289, %291 : vector<8x8xf32>
    %cst_66 = arith.constant 2.08767559E-9 : f32
    %293 = vector.broadcast %cst_66 : f32 to vector<8x8xf32>
    %294 = arith.mulf %293, %259 : vector<8x8xf32>
    %295 = arith.addf %294, %292 : vector<8x8xf32>
    %cst_67 = arith.constant dense<0.000000e+00> : vector<8x8xf32>
    %296 = tpu.matmul %295, %259, %cst_67 {dimension_numbers = #tpu.dot_dimension_numbers<[1], [0], [0], [1], [0, 0, 1, 1], [], []>} : vector<8x8xf32>, vector<8x8xf32>, vector<8x8xf32> -> vector<8x8xf32>
    %297 = arith.addf %296, %281 : vector<8x8xf32>
    %cst_68 = arith.constant dense<0.000000e+00> : vector<8x8xf32>
    %298 = tpu.matmul %297, %259, %cst_68 {dimension_numbers = #tpu.dot_dimension_numbers<[1], [0], [0], [1], [0, 0, 1, 1], [], []>} : vector<8x8xf32>, vector<8x8xf32>, vector<8x8xf32> -> vector<8x8xf32>
    %299 = arith.addf %298, %270 : vector<8x8xf32>
    %cst_69 = arith.constant dense<0.000000e+00> : vector<8x8xf32>
    %300 = tpu.matmul %299, %299, %cst_69 {dimension_numbers = #tpu.dot_dimension_numbers<[1], [0], [0], [1], [0, 0, 1, 1], [], []>} : vector<8x8xf32>, vector<8x8xf32>, vector<8x8xf32> -> vector<8x8xf32>
    %cst_70 = arith.constant dense<0.000000e+00> : vector<8x8xf32>
    %301 = tpu.matmul %300, %300, %cst_70 {dimension_numbers = #tpu.dot_dimension_numbers<[1], [0], [0], [1], [0, 0, 1, 1], [], []>} : vector<8x8xf32>, vector<8x8xf32>, vector<8x8xf32> -> vector<8x8xf32>
    %cst_71 = arith.constant dense<0.000000e+00> : vector<8x8xf32>
    %302 = tpu.matmul %301, %301, %cst_71 {dimension_numbers = #tpu.dot_dimension_numbers<[1], [0], [0], [1], [0, 0, 1, 1], [], []>} : vector<8x8xf32>, vector<8x8xf32>, vector<8x8xf32> -> vector<8x8xf32>
    %303 = vector.shape_cast %242 : vector<1x8xf32> to vector<1x8xf32>
    %304 = vector.broadcast %303 : vector<1x8xf32> to vector<8x8xf32>
    %cst_72 = arith.constant 0.000000e+00 : f32
    %305 = vector.broadcast %cst_72 : f32 to vector<8x112xf32>
    %306 = tpu.concatenate %302, %304, %305 in 1 : vector<8x8xf32>, vector<8x8xf32>, vector<8x112xf32> -> vector<8x128xf32>
    %c0_73 = arith.constant 0 : index
    %c0_74 = arith.constant 0 : index
    %307 = vector.load %arg3[%c0_73, %c0_74] : memref<8x128xf32, #tpu.memory_space<vmem>>, vector<8x128xf32>
    tpu.vector_store %arg3[%c0_73, %c0_74], %306 {strides = array<i32>} : memref<8x128xf32, #tpu.memory_space<vmem>>, vector<8x128xf32>,
    return
  }
}

</mosaic_0001>

<llo_original>
// kernel: inference_model_forward.1
$region0: #{inference_model_forward.1}
  #allocation0 [shape = 'u32[]', space=smem, size = 0x4, offset = 0x4, fixed_abs, tag = 'smem constant byte address 0x4 - core index']
  #allocation1 [shape = 'u32[144,128]{1,0:T(1,128)}', space=vmem, size = 0x12000, scoped, tag = 'internal scratch']
  %s0 = inlined_call_operand.vmem [shape: f32[9,8], index: 0, kind: input, shape index: {}]
  %s1 = inlined_call_operand.vmem [shape: bf16[224,192], index: 1, kind: input, shape index: {}]
  %s2 = inlined_call_operand.vmem [shape: f32[88,192], index: 2, kind: input, shape index: {}]
  %s3 = inlined_call_operand.vmem [shape: f32[8,128], index: 3, kind: output, shape index: {}]
  %s4 = sld [smem:[#allocation0]]
  $region22: #{inference_model_forward.1} parent=0
    _
  %s6 = ssub.s32 1, %s4
  %s7 = scalar_select 0, %s6, %s4
  // Predicated region
  $region2: #{inference_model_forward.1} parent=0 // pred_check
    _
  $region3: #{inference_model_forward.1} parent=0 // pred_check_branch
    %9 = sbr.rel (0) target = $region5
  $region4: #{inference_model_forward.1} parent=0 // pred_region
    _
  $region5: #{inference_model_forward.1} parent=0 // pred_fallthru
    _
  // Predicated region
  $region6: #{inference_model_forward.1} parent=0 // pred_check
    _
  $region7: #{inference_model_forward.1} parent=0 // pred_check_branch
    %11 = sbr.rel (0) target = $region9
  $region8: #{inference_model_forward.1} parent=0 // pred_region
    _
  $region9: #{inference_model_forward.1} parent=0 // pred_fallthru
    _
  // Predicated region
  $region10: #{inference_model_forward.1} parent=0 // pred_check
    _
  $region11: #{inference_model_forward.1} parent=0 // pred_check_branch
    %13 = sbr.rel (0) target = $region13
  $region12: #{inference_model_forward.1} parent=0 // pred_region
    _
  $region13: #{inference_model_forward.1} parent=0 // pred_fallthru
    _
  %v15 = vld [vmem:[%s1] sm:$0xff]
  %v16 = vld [vmem:[%s1 + $0x10] sm:$0xff]
  %v17 = vld [vmem:[%s1 + $0x18] sm:$0xff]
  %v18 = vld [vmem:[%s1 + $0x20] sm:$0xff]
  %v19 = vld [vmem:[%s1 + $0x28] sm:$0xff]
  %v20 = vld [vmem:[%s1 + $0x30] sm:$0xff]
  %v21 = vld [vmem:[%s1 + $0x38] sm:$0xff]
  %v22 = vld [vmem:[%s1 + $0x40] sm:$0xff]
  %v23 = vld [vmem:[%s1 + $0x48] sm:$0xff]
  %v24 = vld [vmem:[%s1 + $0x50] sm:$0xf]
  %v25 = vld [vmem:[%s1 + $0x58] sm:$0xf]
  %v26 = vld [vmem:[%s1 + $0x60] sm:$0xf]
  %v27 = vld [vmem:[%s1 + $0x68] sm:$0xf]
  %v28 = vld [vmem:[%s1 + $0x70] sm:$0xf]
  %v29 = vld [vmem:[%s1 + $0x78] sm:$0xf]
  %v30 = vld [vmem:[%s1 + $0x80] sm:$0xf]
  %v31 = vld [vmem:[%s1 + $0x88] sm:$0xf]
  %v32 = vld [vmem:[%s1 + $0x90] sm:$0xf]
  %v33 = vld [vmem:[%s1 + $0xa0] sm:$0xf]
  %v34 = vld [vmem:[%s1 + $0xa8] sm:$0xf]
  %v35 = vld [vmem:[%s1 + $0xb0] sm:$0xf]
  %v36 = vld [vmem:[%s1 + $0xb8] sm:$0xf]
  %v37 = vld [vmem:[%s1 + $0xc0] sm:$0xf]
  %v38 = vld [vmem:[%s1 + $0xc8] sm:$0xf]
  %v39 = vld [vmem:[%s1 + $0xd0] sm:$0xf]
  %v40 = vld [vmem:[%s1 + $0xd8] sm:$0xf]
  %v41 = vld [vmem:[%s2] ss:$8 sm:$0x3]
  %s42 = scalar_lea.vmem %s2, 1
  %v43 = vld [vmem:[%s42] ss:$8 sm:$0x3]
  %v44 = vld [vmem:[%s2 + $0x2] ss:$0 sm:$0xff]
  %v45 = vld [vmem:[%s2 + $0x3] ss:$0 sm:$0xff]
  %v46 = vld [vmem:[%s2 + $0x4] ss:$0 sm:$0xff]
  %v47 = vld [vmem:[%s2 + $0x5] ss:$0 sm:$0xff]
  %v48 = vld [vmem:[%s2 + $0x10] sm:$0xff]
  %v49 = vld [vmem:[%s2 + $0x20] sm:$0xff]
  %v50 = vld [vmem:[%s2 + $0x30] sm:$0xff]
  %v51 = vld [vmem:[%s2 + $0x40] sm:$0xff]
  %v52 = vld [vmem:[%s2 + $0x50] sm:$0xff]
  %v53 = vld [vmem:[%s2 + $0x60] sm:$0xff]
  %v54 = vld [vmem:[%s2 + $0x70] sm:$0xff]
  %v55 = vld [vmem:[%s2 + $0x80] sm:$0xff]
  %v56 = vld [vmem:[%s2 + $0x90] sm:$0xff]
  %v57 = vld [vmem:[%s2 + $0xa0] sm:$0xff]
  %v58 = vld [vmem:[%s0] sm:$0xff]
  %v59 = vld [vmem:[%s0 + $0x8] sm:$0x1]
  %v60 = vpack.c.bf16 %v58, %v58
  %v62 = vlaneseq
  %v63 = vshrl.u32 %v62, 7
  %v64 = vsub.s32 0, %v63
  %v65 = vrot.slane %v41, %v64
  %v66 = vlaneseq
  %v67 = vshrl.u32 %v66, 7
  %v68 = vsub.s32 1, %v67
  %v69 = vrot.slane %v41, %v68
  %v73 = vunpack.c.l.b16 %v15
  %v74 = vunpack.c.h.b16 %v15
  %v75 = vpack.c.b16 %v73, %v73
  %v76 = vpack.c.b16 %v74, %v74
  %vm77 = vcmask 64512
  %v79 = vsel %vm77, %v60, 0
  %vm81 = vcmask 1043456
  %v83 = vsel %vm81, %v75, 0
  %v86 = vsel %vm81, %v76, 0
  %88 = vmatprep.subr.bf16.mxu0 %v86
  %89 = vmatpush1.bf16.msra.mxu0 %v83
  %90 = vmatprep.subr.bf16.mxu0 0
  %91 = vmatpush1.bf16.msra.mxu0 0
  %92 = vmatprep.subr.bf16.mxu0 0
  %93 = vmatpush1.bf16.msra.mxu0 0
  %94 = vmatprep.subr.bf16.mxu0 0
  %95 = vmatpush1.bf16.msra.mxu0 0
  %96 = vmatprep.subr.bf16.mxu0 0
  %97 = vmatpush1.bf16.msra.mxu0 0
  %98 = vmatprep.subr.bf16.mxu0 0
  %99 = vmatpush1.bf16.msra.mxu0 0
  %100 = vmatprep.subr.bf16.mxu0 0
  %101 = vmatpush1.bf16.msra.mxu0 0
  %102 = vmatprep.subr.bf16.mxu0 0
  %103 = vmatpush1.bf16.msra.mxu0 0
  %104 = vmatprep.subr.bf16.mxu0 0
  %105 = vmatpush1.bf16.msra.mxu0 0
  %106 = vmatprep.subr.bf16.mxu0 0
  %107 = vmatpush1.bf16.msra.mxu0 0
  %108 = vmatprep.subr.bf16.mxu0 0
  %109 = vmatpush1.bf16.msra.mxu0 0
  %110 = vmatprep.subr.bf16.mxu0 0
  %111 = vmatpush1.bf16.msra.mxu0 0
  %112 = vmatprep.subr.bf16.mxu0 0
  %113 = vmatpush1.bf16.msra.mxu0 0
  %114 = vmatprep.subr.bf16.mxu0 0
  %115 = vmatpush1.bf16.msra.mxu0 0
  %116 = vmatprep.subr.bf16.mxu0 0
  %117 = vmatpush1.bf16.msra.mxu0 0
  %118 = vmatprep.subr.bf16.mxu0 0
  %119 = vmatpush1.bf16.msra.mxu0 0
  %120 = vmatprep.mubr.bf16.mxu0 0
  %121 = vmatmul.mubr.bf16.gmra.mrb[0].mxu0 %v79
  %v122 = vpop.f32.mrb[0].mxu0
  %v123 = vadd.f32 %v65, %v122
  %v124 = vpop.f32.mrb[0].mxu0
  %v125 = vadd.f32 %v69, %v124
  %v126 = vpop.f32.mrb[0].mxu0
  %v127 = vpop.f32.mrb[0].mxu0
  %128 = vdwg.mxu0
  %v137 = vunpack.c.l.b16 %v16
  %v138 = vunpack.c.h.b16 %v16
  %v139 = vunpack.c.l.b16 %v17
  %v140 = vunpack.c.h.b16 %v17
  %v141 = vunpack.c.l.b16 %v18
  %v142 = vunpack.c.h.b16 %v18
  %v143 = vunpack.c.l.b16 %v19
  %v144 = vunpack.c.h.b16 %v19
  %v145 = vunpack.c.l.b16 %v20
  %v146 = vunpack.c.h.b16 %v20
  %v147 = vunpack.c.l.b16 %v21
  %v148 = vunpack.c.h.b16 %v21
  %v149 = vunpack.c.l.b16 %v22
  %v150 = vunpack.c.h.b16 %v22
  %v151 = vunpack.c.l.b16 %v23
  %v152 = vunpack.c.h.b16 %v23
  %v153 = vpack.c.b16 %v139, %v137
  %v154 = vpack.c.b16 %v140, %v138
  %v155 = vpack.c.b16 %v143, %v141
  %v156 = vpack.c.b16 %v144, %v142
  %v157 = vpack.c.b16 %v147, %v145
  %v158 = vpack.c.b16 %v148, %v146
  %v159 = vpack.c.b16 %v151, %v149
  %v160 = vpack.c.b16 %v152, %v150
  %v170 = vlaneseq
  %v171 = vshrl.u32 %v170, 7
  %v172 = vsub.s32 0, %v171
  %v173 = vrot.slane %v43, %v172
  %v174 = vlaneseq
  %v175 = vshrl.u32 %v174, 7
  %v176 = vsub.s32 1, %v175
  %v177 = vrot.slane %v43, %v176
  %vm180 = vcmask 523264
  %v182 = vsel %vm180, 0, 0
  %184 = vmatprep.subr.bf16.mxu0 %v154
  %185 = vmatpush1.bf16.msra.mxu0 %v153
  %186 = vmatprep.subr.bf16.mxu0 %v156
  %187 = vmatpush1.bf16.msra.mxu0 %v155
  %188 = vmatprep.subr.bf16.mxu0 %v158
  %189 = vmatpush1.bf16.msra.mxu0 %v157
  %190 = vmatprep.subr.bf16.mxu0 %v160
  %191 = vmatpush1.bf16.msra.mxu0 %v159
  %192 = vmatprep.subr.bf16.mxu0 0
  %193 = vmatpush1.bf16.msra.mxu0 0
  %194 = vmatprep.subr.bf16.mxu0 0
  %195 = vmatpush1.bf16.msra.mxu0 0
  %196 = vmatprep.subr.bf16.mxu0 0
  %197 = vmatpush1.bf16.msra.mxu0 0
  %198 = vmatprep.subr.bf16.mxu0 0
  %199 = vmatpush1.bf16.msra.mxu0 0
  %200 = vmatprep.subr.bf16.mxu0 0
  %201 = vmatpush1.bf16.msra.mxu0 0
  %202 = vmatprep.subr.bf16.mxu0 0
  %203 = vmatpush1.bf16.msra.mxu0 0
  %204 = vmatprep.subr.bf16.mxu0 0
  %205 = vmatpush1.bf16.msra.mxu0 0
  %206 = vmatprep.subr.bf16.mxu0 0
  %207 = vmatpush1.bf16.msra.mxu0 0
  %208 = vmatprep.subr.bf16.mxu0 0
  %209 = vmatpush1.bf16.msra.mxu0 0
  %210 = vmatprep.subr.bf16.mxu0 0
  %211 = vmatpush1.bf16.msra.mxu0 0
  %212 = vmatprep.subr.bf16.mxu0 0
  %213 = vmatpush1.bf16.msra.mxu0 0
  %214 = vmatprep.subr.bf16.mxu0 0
  %215 = vmatpush1.bf16.msra.mxu0 0
  %216 = vmatprep.mubr.bf16.mxu0 0
  %217 = vmatmul.mubr.bf16.gmra.mrb[0].mxu0 %v182
  %v218 = vpop.f32.mrb[0].mxu0
  %v219 = vadd.f32 %v173, %v218
  %v220 = vpop.f32.mrb[0].mxu0
  %v221 = vadd.f32 %v177, %v220
  %v222 = vpop.f32.mrb[0].mxu0
  %v223 = vpop.f32.mrb[0].mxu0
  %224 = vdwg.mxu0
  %v225 = vadd.f32 %v123, %v219
  %v226 = vxor.u32 %v225, 2147483648
  %v227 = vmul.f32 %v226, 1.442695
  %v228 = vpow.pop %v227
  %v229 = vadd.f32 %v228, 1.0
  %v230 = vrcp.pop %v229
  %v231 = vmul.f32 1.0, %v230
  %v232 = vmul.f32 %v231, %v221
  %v233 = vadd.f32 %v125, %v232
  %v234 = vtanh.pop %v233
  %v235 = vsub.f32 1.0, %v231
  %237 = vrot.lane.b32.xlu0 %v234, 64
  %v238 = vpop.permute.xlu0 %237
  %v240 = vmul.f32 %v235, %v238
  %v241 = vmul.f32 %v231, 0.0
  %v242 = vadd.f32 %v240, %v241
  %v243 = vpack.c.bf16 %v242, %v242
  %245 = vrot.lane.b32.xlu0 %v243, 64
  %v246 = vpop.permute.xlu0 %245
  %v248 = vsel %vm180, %v246, 0
  %250 = vmatprep.subr.bf16.mxu0 %v154
  %251 = vmatpush1.bf16.msra.mxu0 %v153
  %252 = vmatprep.subr.bf16.mxu0 %v156
  %253 = vmatpush1.bf16.msra.mxu0 %v155
  %254 = vmatprep.subr.bf16.mxu0 %v158
  %255 = vmatpush1.bf16.msra.mxu0 %v157
  %256 = vmatprep.subr.bf16.mxu0 %v160
  %257 = vmatpush1.bf16.msra.mxu0 %v159
  %258 = vmatprep.subr.bf16.mxu0 0
  %259 = vmatpush1.bf16.msra.mxu0 0
  %260 = vmatprep.subr.bf16.mxu0 0
  %261 = vmatpush1.bf16.msra.mxu0 0
  %262 = vmatprep.subr.bf16.mxu0 0
  %263 = vmatpush1.bf16.msra.mxu0 0
  %264 = vmatprep.subr.bf16.mxu0 0
  %265 = vmatpush1.bf16.msra.mxu0 0
  %266 = vmatprep.subr.bf16.mxu0 0
  %267 = vmatpush1.bf16.msra.mxu0 0
  %268 = vmatprep.subr.bf16.mxu0 0
  %269 = vmatpush1.bf16.msra.mxu0 0
  %270 = vmatprep.subr.bf16.mxu0 0
  %271 = vmatpush1.bf16.msra.mxu0 0
  %272 = vmatprep.subr.bf16.mxu0 0
  %273 = vmatpush1.bf16.msra.mxu0 0
  %274 = vmatprep.subr.bf16.mxu0 0
  %275 = vmatpush1.bf16.msra.mxu0 0
  %276 = vmatprep.subr.bf16.mxu0 0
  %277 = vmatpush1.bf16.msra.mxu0 0
  %278 = vmatprep.subr.bf16.mxu0 0
  %279 = vmatpush1.bf16.msra.mxu0 0
  %280 = vmatprep.subr.bf16.mxu0 0
  %281 = vmatpush1.bf16.msra.mxu0 0
  %282 = vmatprep.mubr.bf16.mxu0 0
  %283 = vmatmul.mubr.bf16.gmra.mrb[0].mxu0 %v248
  %v284 = vpop.f32.mrb[0].mxu0
  %v285 = vadd.f32 %v173, %v284
  %v286 = vpop.f32.mrb[0].mxu0
  %v287 = vadd.f32 %v177, %v286
  %v288 = vpop.f32.mrb[0].mxu0
  %v289 = vpop.f32.mrb[0].mxu0
  %290 = vdwg.mxu0
  %v292 = vrot.slane %v285, 7
  %v294 = vadd.f32 %v123, %v292
  %v295 = vxor.u32 %v294, 2147483648
  %v296 = vmul.f32 %v295, 1.442695
  %v297 = vpow.pop %v296
  %v298 = vadd.f32 %v297, 1.0
  %v299 = vrcp.pop %v298
  %v300 = vmul.f32 1.0, %v299
  %v302 = vrot.slane %v287, 7
  %v304 = vmul.f32 %v300, %v302
  %v305 = vadd.f32 %v125, %v304
  %v306 = vtanh.pop %v305
  %v307 = vsub.f32 1.0, %v300
  %309 = vrot.lane.b32.xlu0 %v306, 64
  %v310 = vpop.permute.xlu0 %309
  %v312 = vmul.f32 %v307, %v310
  %v314 = vrot.slane %v242, 7
  %v316 = vmul.f32 %v300, %v314
  %v317 = vadd.f32 %v312, %v316
  %v318 = vpack.c.bf16 %v317, %v317
  %v320 = vshrl.u32 %v318, 16
  %322 = vrot.lane.b32.xlu0 %v320, 64
  %v323 = vpop.permute.xlu0 %322
  %v325 = vsel %vm180, %v323, 0
  %327 = vmatprep.subr.bf16.mxu0 %v154
  %328 = vmatpush1.bf16.msra.mxu0 %v153
  %329 = vmatprep.subr.bf16.mxu0 %v156
  %330 = vmatpush1.bf16.msra.mxu0 %v155
  %331 = vmatprep.subr.bf16.mxu0 %v158
  %332 = vmatpush1.bf16.msra.mxu0 %v157
  %333 = vmatprep.subr.bf16.mxu0 %v160
  %334 = vmatpush1.bf16.msra.mxu0 %v159
  %335 = vmatprep.subr.bf16.mxu0 0
  %336 = vmatpush1.bf16.msra.mxu0 0
  %337 = vmatprep.subr.bf16.mxu0 0
  %338 = vmatpush1.bf16.msra.mxu0 0
  %339 = vmatprep.subr.bf16.mxu0 0
  %340 = vmatpush1.bf16.msra.mxu0 0
  %341 = vmatprep.subr.bf16.mxu0 0
  %342 = vmatpush1.bf16.msra.mxu0 0
  %343 = vmatprep.subr.bf16.mxu0 0
  %344 = vmatpush1.bf16.msra.mxu0 0
  %345 = vmatprep.subr.bf16.mxu0 0
  %346 = vmatpush1.bf16.msra.mxu0 0
  %347 = vmatprep.subr.bf16.mxu0 0
  %348 = vmatpush1.bf16.msra.mxu0 0
  %349 = vmatprep.subr.bf16.mxu0 0
  %350 = vmatpush1.bf16.msra.mxu0 0
  %351 = vmatprep.subr.bf16.mxu0 0
  %352 = vmatpush1.bf16.msra.mxu0 0
  %353 = vmatprep.subr.bf16.mxu0 0
  %354 = vmatpush1.bf16.msra.mxu0 0
  %355 = vmatprep.subr.bf16.mxu0 0
  %356 = vmatpush1.bf16.msra.mxu0 0
  %357 = vmatprep.subr.bf16.mxu0 0
  %358 = vmatpush1.bf16.msra.mxu0 0
  %359 = vmatprep.mubr.bf16.mxu0 0
  %360 = vmatmul.mubr.bf16.gmra.mrb[0].mxu0 %v325
  %v361 = vpop.f32.mrb[0].mxu0
  %v362 = vadd.f32 %v173, %v361
  %v363 = vpop.f32.mrb[0].mxu0
  %v364 = vadd.f32 %v177, %v363
  %v365 = vpop.f32.mrb[0].mxu0
  %v366 = vpop.f32.mrb[0].mxu0
  %367 = vdwg.mxu0
  %v369 = vrot.slane %v362, 6
  %v371 = vadd.f32 %v123, %v369
  %v372 = vxor.u32 %v371, 2147483648
  %v373 = vmul.f32 %v372, 1.442695
  %v374 = vpow.pop %v373
  %v375 = vadd.f32 %v374, 1.0
  %v376 = vrcp.pop %v375
  %v377 = vmul.f32 1.0, %v376
  %v379 = vrot.slane %v364, 6
  %v381 = vmul.f32 %v377, %v379
  %v382 = vadd.f32 %v125, %v381
  %v383 = vtanh.pop %v382
  %v384 = vsub.f32 1.0, %v377
  %386 = vrot.lane.b32.xlu0 %v383, 64
  %v387 = vpop.permute.xlu0 %386
  %v389 = vmul.f32 %v384, %v387
  %v391 = vrot.slane %v317, 7
  %v393 = vmul.f32 %v377, %v391
  %v394 = vadd.f32 %v389, %v393
  %v395 = vpack.c.bf16 %v394, %v394
  %v397 = vrot.slane %v395, 1
  %398 = vrot.lane.b32.xlu0 %v397, 64
  %v399 = vpop.permute.xlu0 %398
  %v401 = vsel %vm180, %v399, 0
  %403 = vmatprep.subr.bf16.mxu0 %v154
  %404 = vmatpush1.bf16.msra.mxu0 %v153
  %405 = vmatprep.subr.bf16.mxu0 %v156
  %406 = vmatpush1.bf16.msra.mxu0 %v155
  %407 = vmatprep.subr.bf16.mxu0 %v158
  %408 = vmatpush1.bf16.msra.mxu0 %v157
  %409 = vmatprep.subr.bf16.mxu0 %v160
  %410 = vmatpush1.bf16.msra.mxu0 %v159
  %411 = vmatprep.subr.bf16.mxu0 0
  %412 = vmatpush1.bf16.msra.mxu0 0
  %413 = vmatprep.subr.bf16.mxu0 0
  %414 = vmatpush1.bf16.msra.mxu0 0
  %415 = vmatprep.subr.bf16.mxu0 0
  %416 = vmatpush1.bf16.msra.mxu0 0
  %417 = vmatprep.subr.bf16.mxu0 0
  %418 = vmatpush1.bf16.msra.mxu0 0
  %419 = vmatprep.subr.bf16.mxu0 0
  %420 = vmatpush1.bf16.msra.mxu0 0
  %421 = vmatprep.subr.bf16.mxu0 0
  %422 = vmatpush1.bf16.msra.mxu0 0
  %423 = vmatprep.subr.bf16.mxu0 0
  %424 = vmatpush1.bf16.msra.mxu0 0
  %425 = vmatprep.subr.bf16.mxu0 0
  %426 = vmatpush1.bf16.msra.mxu0 0
  %427 = vmatprep.subr.bf16.mxu0 0
  %428 = vmatpush1.bf16.msra.mxu0 0
  %429 = vmatprep.subr.bf16.mxu0 0
  %430 = vmatpush1.bf16.msra.mxu0 0
  %431 = vmatprep.subr.bf16.mxu0 0
  %432 = vmatpush1.bf16.msra.mxu0 0
  %433 = vmatprep.subr.bf16.mxu0 0
  %434 = vmatpush1.bf16.msra.mxu0 0
  %435 = vmatprep.mubr.bf16.mxu0 0
  %436 = vmatmul.mubr.bf16.gmra.mrb[0].mxu0 %v401
  %v437 = vpop.f32.mrb[0].mxu0
  %v438 = vadd.f32 %v173, %v437
  %v439 = vpop.f32.mrb[0].mxu0
  %v440 = vadd.f32 %v177, %v439
  %v441 = vpop.f32.mrb[0].mxu0
  %v442 = vpop.f32.mrb[0].mxu0
  %443 = vdwg.mxu0
  %v445 = vrot.slane %v438, 5
  %v447 = vadd.f32 %v123, %v445
  %v448 = vxor.u32 %v447, 2147483648
  %v449 = vmul.f32 %v448, 1.442695
  %v450 = vpow.pop %v449
  %v451 = vadd.f32 %v450, 1.0
  %v452 = vrcp.pop %v451
  %v453 = vmul.f32 1.0, %v452
  %v455 = vrot.slane %v440, 5
  %v457 = vmul.f32 %v453, %v455
  %v458 = vadd.f32 %v125, %v457
  %v459 = vtanh.pop %v458
  %v460 = vsub.f32 1.0, %v453
  %462 = vrot.lane.b32.xlu0 %v459, 64
  %v463 = vpop.permute.xlu0 %462
  %v465 = vmul.f32 %v460, %v463
  %v467 = vrot.slane %v394, 7
  %v469 = vmul.f32 %v453, %v467
  %v470 = vadd.f32 %v465, %v469
  %v471 = vpack.c.bf16 %v470, %v470
  %v473 = vshrl.u32 %v471, 16
  %v475 = vrot.slane %v473, 1
  %476 = vrot.lane.b32.xlu0 %v475, 64
  %v477 = vpop.permute.xlu0 %476
  %v479 = vsel %vm180, %v477, 0
  %481 = vmatprep.subr.bf16.mxu0 %v154
  %482 = vmatpush1.bf16.msra.mxu0 %v153
  %483 = vmatprep.subr.bf16.mxu0 %v156
  %484 = vmatpush1.bf16.msra.mxu0 %v155
  %485 = vmatprep.subr.bf16.mxu0 %v158
  %486 = vmatpush1.bf16.msra.mxu0 %v157
  %487 = vmatprep.subr.bf16.mxu0 %v160
  %488 = vmatpush1.bf16.msra.mxu0 %v159
  %489 = vmatprep.subr.bf16.mxu0 0
  %490 = vmatpush1.bf16.msra.mxu0 0
  %491 = vmatprep.subr.bf16.mxu0 0
  %492 = vmatpush1.bf16.msra.mxu0 0
  %493 = vmatprep.subr.bf16.mxu0 0
  %494 = vmatpush1.bf16.msra.mxu0 0
  %495 = vmatprep.subr.bf16.mxu0 0
  %496 = vmatpush1.bf16.msra.mxu0 0
  %497 = vmatprep.subr.bf16.mxu0 0
  %498 = vmatpush1.bf16.msra.mxu0 0
  %499 = vmatprep.subr.bf16.mxu0 0
  %500 = vmatpush1.bf16.msra.mxu0 0
  %501 = vmatprep.subr.bf16.mxu0 0
  %502 = vmatpush1.bf16.msra.mxu0 0
  %503 = vmatprep.subr.bf16.mxu0 0
  %504 = vmatpush1.bf16.msra.mxu0 0
  %505 = vmatprep.subr.bf16.mxu0 0
  %506 = vmatpush1.bf16.msra.mxu0 0
  %507 = vmatprep.subr.bf16.mxu0 0
  %508 = vmatpush1.bf16.msra.mxu0 0
  %509 = vmatprep.subr.bf16.mxu0 0
  %510 = vmatpush1.bf16.msra.mxu0 0
  %511 = vmatprep.subr.bf16.mxu0 0
  %512 = vmatpush1.bf16.msra.mxu0 0
  %513 = vmatprep.mubr.bf16.mxu0 0
  %514 = vmatmul.mubr.bf16.gmra.mrb[0].mxu0 %v479
  %v515 = vpop.f32.mrb[0].mxu0
  %v516 = vadd.f32 %v173, %v515
  %v517 = vpop.f32.mrb[0].mxu0
  %v518 = vadd.f32 %v177, %v517
  %v519 = vpop.f32.mrb[0].mxu0
  %v520 = vpop.f32.mrb[0].mxu0
  %521 = vdwg.mxu0
  %v523 = vrot.slane %v516, 4
  %v525 = vadd.f32 %v123, %v523
  %v526 = vxor.u32 %v525, 2147483648
  %v527 = vmul.f32 %v526, 1.442695
  %v528 = vpow.pop %v527
  %v529 = vadd.f32 %v528, 1.0
  %v530 = vrcp.pop %v529
  %v531 = vmul.f32 1.0, %v530
  %v533 = vrot.slane %v518, 4
  %v535 = vmul.f32 %v531, %v533
  %v536 = vadd.f32 %v125, %v535
  %v537 = vtanh.pop %v536
  %v538 = vsub.f32 1.0, %v531
  %540 = vrot.lane.b32.xlu0 %v537, 64
  %v541 = vpop.permute.xlu0 %540
  %v543 = vmul.f32 %v538, %v541
  %v545 = vrot.slane %v470, 7
  %v547 = vmul.f32 %v531, %v545
  %v548 = vadd.f32 %v543, %v547
  %v549 = vpack.c.bf16 %v548, %v548
  %v551 = vrot.slane %v549, 2
  %552 = vrot.lane.b32.xlu0 %v551, 64
  %v553 = vpop.permute.xlu0 %552
  %v555 = vsel %vm180, %v553, 0
  %557 = vmatprep.subr.bf16.mxu0 %v154
  %558 = vmatpush1.bf16.msra.mxu0 %v153
  %559 = vmatprep.subr.bf16.mxu0 %v156
  %560 = vmatpush1.bf16.msra.mxu0 %v155
  %561 = vmatprep.subr.bf16.mxu0 %v158
  %562 = vmatpush1.bf16.msra.mxu0 %v157
  %563 = vmatprep.subr.bf16.mxu0 %v160
  %564 = vmatpush1.bf16.msra.mxu0 %v159
  %565 = vmatprep.subr.bf16.mxu0 0
  %566 = vmatpush1.bf16.msra.mxu0 0
  %567 = vmatprep.subr.bf16.mxu0 0
  %568 = vmatpush1.bf16.msra.mxu0 0
  %569 = vmatprep.subr.bf16.mxu0 0
  %570 = vmatpush1.bf16.msra.mxu0 0
  %571 = vmatprep.subr.bf16.mxu0 0
  %572 = vmatpush1.bf16.msra.mxu0 0
  %573 = vmatprep.subr.bf16.mxu0 0
  %574 = vmatpush1.bf16.msra.mxu0 0
  %575 = vmatprep.subr.bf16.mxu0 0
  %576 = vmatpush1.bf16.msra.mxu0 0
  %577 = vmatprep.subr.bf16.mxu0 0
  %578 = vmatpush1.bf16.msra.mxu0 0
  %579 = vmatprep.subr.bf16.mxu0 0
  %580 = vmatpush1.bf16.msra.mxu0 0
  %581 = vmatprep.subr.bf16.mxu0 0
  %582 = vmatpush1.bf16.msra.mxu0 0
  %583 = vmatprep.subr.bf16.mxu0 0
  %584 = vmatpush1.bf16.msra.mxu0 0
  %585 = vmatprep.subr.bf16.mxu0 0
  %586 = vmatpush1.bf16.msra.mxu0 0
  %587 = vmatprep.subr.bf16.mxu0 0
  %588 = vmatpush1.bf16.msra.mxu0 0
  %589 = vmatprep.mubr.bf16.mxu0 0
  %590 = vmatmul.mubr.bf16.gmra.mrb[0].mxu0 %v555
  %v591 = vpop.f32.mrb[0].mxu0
  %v592 = vadd.f32 %v173, %v591
  %v593 = vpop.f32.mrb[0].mxu0
  %v594 = vadd.f32 %v177, %v593
  %v595 = vpop.f32.mrb[0].mxu0
  %v596 = vpop.f32.mrb[0].mxu0
  %597 = vdwg.mxu0
  %v599 = vrot.slane %v592, 3
  %v601 = vadd.f32 %v123, %v599
  %v602 = vxor.u32 %v601, 2147483648
  %v603 = vmul.f32 %v602, 1.442695
  %v604 = vpow.pop %v603
  %v605 = vadd.f32 %v604, 1.0
  %v606 = vrcp.pop %v605
  %v607 = vmul.f32 1.0, %v606
  %v609 = vrot.slane %v594, 3
  %v611 = vmul.f32 %v607, %v609
  %v612 = vadd.f32 %v125, %v611
  %v613 = vtanh.pop %v612
  %v614 = vsub.f32 1.0, %v607
  %616 = vrot.lane.b32.xlu0 %v613, 64
  %v617 = vpop.permute.xlu0 %616
  %v619 = vmul.f32 %v614, %v617
  %v621 = vrot.slane %v548, 7
  %v623 = vmul.f32 %v607, %v621
  %v624 = vadd.f32 %v619, %v623
  %v625 = vpack.c.bf16 %v624, %v624
  %v627 = vshrl.u32 %v625, 16
  %v629 = vrot.slane %v627, 2
  %630 = vrot.lane.b32.xlu0 %v629, 64
  %v631 = vpop.permute.xlu0 %630
  %v633 = vsel %vm180, %v631, 0
  %635 = vmatprep.subr.bf16.mxu0 %v154
  %636 = vmatpush1.bf16.msra.mxu0 %v153
  %637 = vmatprep.subr.bf16.mxu0 %v156
  %638 = vmatpush1.bf16.msra.mxu0 %v155
  %639 = vmatprep.subr.bf16.mxu0 %v158
  %640 = vmatpush1.bf16.msra.mxu0 %v157
  %641 = vmatprep.subr.bf16.mxu0 %v160
  %642 = vmatpush1.bf16.msra.mxu0 %v159
  %643 = vmatprep.subr.bf16.mxu0 0
  %644 = vmatpush1.bf16.msra.mxu0 0
  %645 = vmatprep.subr.bf16.mxu0 0
  %646 = vmatpush1.bf16.msra.mxu0 0
  %647 = vmatprep.subr.bf16.mxu0 0
  %648 = vmatpush1.bf16.msra.mxu0 0
  %649 = vmatprep.subr.bf16.mxu0 0
  %650 = vmatpush1.bf16.msra.mxu0 0
  %651 = vmatprep.subr.bf16.mxu0 0
  %652 = vmatpush1.bf16.msra.mxu0 0
  %653 = vmatprep.subr.bf16.mxu0 0
  %654 = vmatpush1.bf16.msra.mxu0 0
  %655 = vmatprep.subr.bf16.mxu0 0
  %656 = vmatpush1.bf16.msra.mxu0 0
  %657 = vmatprep.subr.bf16.mxu0 0
  %658 = vmatpush1.bf16.msra.mxu0 0
  %659 = vmatprep.subr.bf16.mxu0 0
  %660 = vmatpush1.bf16.msra.mxu0 0
  %661 = vmatprep.subr.bf16.mxu0 0
  %662 = vmatpush1.bf16.msra.mxu0 0
  %663 = vmatprep.subr.bf16.mxu0 0
  %664 = vmatpush1.bf16.msra.mxu0 0
  %665 = vmatprep.subr.bf16.mxu0 0
  %666 = vmatpush1.bf16.msra.mxu0 0
  %667 = vmatprep.mubr.bf16.mxu0 0
  %668 = vmatmul.mubr.bf16.gmra.mrb[0].mxu0 %v633
  %v669 = vpop.f32.mrb[0].mxu0
  %v670 = vadd.f32 %v173, %v669
  %v671 = vpop.f32.mrb[0].mxu0
  %v672 = vadd.f32 %v177, %v671
  %v673 = vpop.f32.mrb[0].mxu0
  %v674 = vpop.f32.mrb[0].mxu0
  %675 = vdwg.mxu0
  %v677 = vrot.slane %v670, 2
  %v679 = vadd.f32 %v123, %v677
  %v680 = vxor.u32 %v679, 2147483648
  %v681 = vmul.f32 %v680, 1.442695
  %v682 = vpow.pop %v681
  %v683 = vadd.f32 %v682, 1.0
  %v684 = vrcp.pop %v683
  %v685 = vmul.f32 1.0, %v684
  %v687 = vrot.slane %v672, 2
  %v689 = vmul.f32 %v685, %v687
  %v690 = vadd.f32 %v125, %v689
  %v691 = vtanh.pop %v690
  %v692 = vsub.f32 1.0, %v685
  %694 = vrot.lane.b32.xlu0 %v691, 64
  %v695 = vpop.permute.xlu0 %694
  %v697 = vmul.f32 %v692, %v695
  %v699 = vrot.slane %v624, 7
  %v701 = vmul.f32 %v685, %v699
  %v702 = vadd.f32 %v697, %v701
  %v703 = vpack.c.bf16 %v702, %v702
  %v705 = vrot.slane %v703, 3
  %706 = vrot.lane.b32.xlu0 %v705, 64
  %v707 = vpop.permute.xlu0 %706
  %v709 = vsel %vm180, %v707, 0
  %711 = vmatprep.subr.bf16.mxu0 %v154
  %712 = vmatpush1.bf16.msra.mxu0 %v153
  %713 = vmatprep.subr.bf16.mxu0 %v156
  %714 = vmatpush1.bf16.msra.mxu0 %v155
  %715 = vmatprep.subr.bf16.mxu0 %v158
  %716 = vmatpush1.bf16.msra.mxu0 %v157
  %717 = vmatprep.subr.bf16.mxu0 %v160
  %718 = vmatpush1.bf16.msra.mxu0 %v159
  %719 = vmatprep.subr.bf16.mxu0 0
  %720 = vmatpush1.bf16.msra.mxu0 0
  %721 = vmatprep.subr.bf16.mxu0 0
  %722 = vmatpush1.bf16.msra.mxu0 0
  %723 = vmatprep.subr.bf16.mxu0 0
  %724 = vmatpush1.bf16.msra.mxu0 0
  %725 = vmatprep.subr.bf16.mxu0 0
  %726 = vmatpush1.bf16.msra.mxu0 0
  %727 = vmatprep.subr.bf16.mxu0 0
  %728 = vmatpush1.bf16.msra.mxu0 0
  %729 = vmatprep.subr.bf16.mxu0 0
  %730 = vmatpush1.bf16.msra.mxu0 0
  %731 = vmatprep.subr.bf16.mxu0 0
  %732 = vmatpush1.bf16.msra.mxu0 0
  %733 = vmatprep.subr.bf16.mxu0 0
  %734 = vmatpush1.bf16.msra.mxu0 0
  %735 = vmatprep.subr.bf16.mxu0 0
  %736 = vmatpush1.bf16.msra.mxu0 0
  %737 = vmatprep.subr.bf16.mxu0 0
  %738 = vmatpush1.bf16.msra.mxu0 0
  %739 = vmatprep.subr.bf16.mxu0 0
  %740 = vmatpush1.bf16.msra.mxu0 0
  %741 = vmatprep.subr.bf16.mxu0 0
  %742 = vmatpush1.bf16.msra.mxu0 0
  %743 = vmatprep.mubr.bf16.mxu0 0
  %744 = vmatmul.mubr.bf16.gmra.mrb[0].mxu0 %v709
  %v745 = vpop.f32.mrb[0].mxu0
  %v746 = vadd.f32 %v173, %v745
  %v747 = vpop.f32.mrb[0].mxu0
  %v748 = vadd.f32 %v177, %v747
  %v749 = vpop.f32.mrb[0].mxu0
  %v750 = vpop.f32.mrb[0].mxu0
  %751 = vdwg.mxu0
  %v753 = vrot.slane %v746, 1
  %v755 = vadd.f32 %v123, %v753
  %v756 = vxor.u32 %v755, 2147483648
  %v757 = vmul.f32 %v756, 1.442695
  %v758 = vpow.pop %v757
  %v759 = vadd.f32 %v758, 1.0
  %v760 = vrcp.pop %v759
  %v761 = vmul.f32 1.0, %v760
  %v763 = vrot.slane %v748, 1
  %v765 = vmul.f32 %v761, %v763
  %v766 = vadd.f32 %v125, %v765
  %v767 = vtanh.pop %v766
  %v768 = vsub.f32 1.0, %v761
  %770 = vrot.lane.b32.xlu0 %v767, 64
  %v771 = vpop.permute.xlu0 %770
  %v773 = vmul.f32 %v768, %v771
  %v775 = vrot.slane %v702, 7
  %v777 = vmul.f32 %v761, %v775
  %v778 = vadd.f32 %v773, %v777
  %v780 = vrot.slane %v778, 7
  %781 = vrot.lane.b32.xlu0 %v780, 72
  %v782 = vpop.permute.xlu0 %781
  %v784 = vsel %vm77, %v59, %v782
  %v785 = vpack.c.bf16 %v784, %v784
  %v795 = vunpack.c.l.b16 %v24
  %v796 = vunpack.c.l.b16 %v25
  %v797 = vunpack.c.l.b16 %v26
  %v798 = vunpack.c.l.b16 %v27
  %v799 = vunpack.c.l.b16 %v28
  %v800 = vunpack.c.l.b16 %v29
  %v801 = vunpack.c.l.b16 %v30
  %v802 = vunpack.c.l.b16 %v31
  %v803 = vunpack.c.l.b16 %v32
  %v804 = vpack.c.b16 %v796, %v795
  %v805 = vpack.c.b16 %v798, %v797
  %v806 = vpack.c.b16 %v800, %v799
  %v807 = vpack.c.b16 %v802, %v801
  %v808 = vpack.c.b16 %v803, %v803
  %vm813 = vcmask 588800
  %v815 = vsel %vm813, %v785, 0
  %v818 = vsel %vm81, %v808, 0
  %820 = vmatprep.subr.bf16.mxu0 0
  %821 = vmatpush1.bf16.msra.mxu0 %v804
  %822 = vmatprep.subr.bf16.mxu0 0
  %823 = vmatpush1.bf16.msra.mxu0 %v805
  %824 = vmatprep.subr.bf16.mxu0 0
  %825 = vmatpush1.bf16.msra.mxu0 %v806
  %826 = vmatprep.subr.bf16.mxu0 0
  %827 = vmatpush1.bf16.msra.mxu0 %v807
  %828 = vmatprep.subr.bf16.mxu0 0
  %829 = vmatpush1.bf16.msra.mxu0 %v818
  %830 = vmatprep.subr.bf16.mxu0 0
  %831 = vmatpush1.bf16.msra.mxu0 0
  %832 = vmatprep.subr.bf16.mxu0 0
  %833 = vmatpush1.bf16.msra.mxu0 0
  %834 = vmatprep.subr.bf16.mxu0 0
  %835 = vmatpush1.bf16.msra.mxu0 0
  %836 = vmatprep.subr.bf16.mxu0 0
  %837 = vmatpush1.bf16.msra.mxu0 0
  %838 = vmatprep.subr.bf16.mxu0 0
  %839 = vmatpush1.bf16.msra.mxu0 0
  %840 = vmatprep.subr.bf16.mxu0 0
  %841 = vmatpush1.bf16.msra.mxu0 0
  %842 = vmatprep.subr.bf16.mxu0 0
  %843 = vmatpush1.bf16.msra.mxu0 0
  %844 = vmatprep.subr.bf16.mxu0 0
  %845 = vmatpush1.bf16.msra.mxu0 0
  %846 = vmatprep.subr.bf16.mxu0 0
  %847 = vmatpush1.bf16.msra.mxu0 0
  %848 = vmatprep.subr.bf16.mxu0 0
  %849 = vmatpush1.bf16.msra.mxu0 0
  %850 = vmatprep.subr.bf16.mxu0 0
  %851 = vmatpush1.bf16.msra.mxu0 0
  %852 = vmatprep.mubr.bf16.mxu0 0
  %853 = vmatmul.mubr.bf16.gmra.mrb[0].mxu0 %v815
  %v854 = vpop.f32.mrb[0].mxu0
  %v855 = vadd.f32 %v44, %v854
  %v856 = vpop.f32.mrb[0].mxu0
  %v857 = vpop.f32.mrb[0].mxu0
  %v858 = vpop.f32.mrb[0].mxu0
  %859 = vdwg.mxu0
  %v860 = vadd.f32 %v855, %v45
  %v861 = vxor.u32 %v860, 2147483648
  %v862 = vmul.f32 %v861, 1.442695
  %v863 = vpow.pop %v862
  %v864 = vadd.f32 %v863, 1.0
  %v865 = vrcp.pop %v864
  %v866 = vmul.f32 1.0, %v865
  %868 = vrot.lane.b32.xlu0 %v45, 64
  %v869 = vpop.permute.xlu0 %868
  %v871 = vmul.f32 %v866, %v869
  %873 = vrot.lane.b32.xlu0 %v871, 64
  %v874 = vpop.permute.xlu0 %873
  %v876 = vadd.f32 %v855, %v874
  %v877 = vtanh.pop %v876
  %v878 = vsub.f32 1.0, %v866
  %880 = vrot.lane.b32.xlu0 %v877, 96
  %v881 = vpop.permute.xlu0 %880
  %v883 = vmul.f32 %v878, %v881
  %v884 = vpack.c.bf16 %v883, %v883
  %886 = vrot.lane.b32.xlu0 %v884, 96
  %v887 = vpop.permute.xlu0 %886
  %v892 = vunpack.c.l.b16 %v33
  %v893 = vunpack.c.l.b16 %v34
  %v894 = vunpack.c.l.b16 %v35
  %v895 = vunpack.c.l.b16 %v36
  %v896 = vpack.c.b16 %v893, %v892
  %v897 = vpack.c.b16 %v895, %v894
  %vm900 = vcmask 261120
  %v902 = vsel %vm900, %v887, 0
  %904 = vmatprep.subr.bf16.mxu0 0
  %905 = vmatpush1.bf16.msra.mxu0 %v896
  %906 = vmatprep.subr.bf16.mxu0 0
  %907 = vmatpush1.bf16.msra.mxu0 %v897
  %908 = vmatprep.subr.bf16.mxu0 0
  %909 = vmatpush1.bf16.msra.mxu0 0
  %910 = vmatprep.subr.bf16.mxu0 0
  %911 = vmatpush1.bf16.msra.mxu0 0
  %912 = vmatprep.subr.bf16.mxu0 0
  %913 = vmatpush1.bf16.msra.mxu0 0
  %914 = vmatprep.subr.bf16.mxu0 0
  %915 = vmatpush1.bf16.msra.mxu0 0
  %916 = vmatprep.subr.bf16.mxu0 0
  %917 = vmatpush1.bf16.msra.mxu0 0
  %918 = vmatprep.subr.bf16.mxu0 0
  %919 = vmatpush1.bf16.msra.mxu0 0
  %920 = vmatprep.subr.bf16.mxu0 0
  %921 = vmatpush1.bf16.msra.mxu0 0
  %922 = vmatprep.subr.bf16.mxu0 0
  %923 = vmatpush1.bf16.msra.mxu0 0
  %924 = vmatprep.subr.bf16.mxu0 0
  %925 = vmatpush1.bf16.msra.mxu0 0
  %926 = vmatprep.subr.bf16.mxu0 0
  %927 = vmatpush1.bf16.msra.mxu0 0
  %928 = vmatprep.subr.bf16.mxu0 0
  %929 = vmatpush1.bf16.msra.mxu0 0
  %930 = vmatprep.subr.bf16.mxu0 0
  %931 = vmatpush1.bf16.msra.mxu0 0
  %932 = vmatprep.subr.bf16.mxu0 0
  %933 = vmatpush1.bf16.msra.mxu0 0
  %934 = vmatprep.subr.bf16.mxu0 0
  %935 = vmatpush1.bf16.msra.mxu0 0
  %936 = vmatprep.mubr.bf16.mxu0 0
  %937 = vmatmul.mubr.bf16.gmra.mrb[0].mxu0 %v902
  %v938 = vpop.f32.mrb[0].mxu0
  %v939 = vadd.f32 %v46, %v938
  %v940 = vpop.f32.mrb[0].mxu0
  %v941 = vpop.f32.mrb[0].mxu0
  %v942 = vpop.f32.mrb[0].mxu0
  %943 = vdwg.mxu0
  %v944 = vmax.f32 %v939, 0.0
  %v945 = vpack.c.bf16 %v944, %v944
  %v950 = vunpack.c.l.b16 %v37
  %v951 = vunpack.c.l.b16 %v38
  %v952 = vunpack.c.l.b16 %v39
  %v953 = vunpack.c.l.b16 %v40
  %v954 = vpack.c.b16 %v951, %v950
  %v955 = vpack.c.b16 %v953, %v952
  %v959 = vsel %vm900, %v945, 0
  %961 = vmatprep.subr.bf16.mxu0 0
  %962 = vmatpush1.bf16.msra.mxu0 %v954
  %963 = vmatprep.subr.bf16.mxu0 0
  %964 = vmatpush1.bf16.msra.mxu0 %v955
  %965 = vmatprep.subr.bf16.mxu0 0
  %966 = vmatpush1.bf16.msra.mxu0 0
  %967 = vmatprep.subr.bf16.mxu0 0
  %968 = vmatpush1.bf16.msra.mxu0 0
  %969 = vmatprep.subr.bf16.mxu0 0
  %970 = vmatpush1.bf16.msra.mxu0 0
  %971 = vmatprep.subr.bf16.mxu0 0
  %972 = vmatpush1.bf16.msra.mxu0 0
  %973 = vmatprep.subr.bf16.mxu0 0
  %974 = vmatpush1.bf16.msra.mxu0 0
  %975 = vmatprep.subr.bf16.mxu0 0
  %976 = vmatpush1.bf16.msra.mxu0 0
  %977 = vmatprep.subr.bf16.mxu0 0
  %978 = vmatpush1.bf16.msra.mxu0 0
  %979 = vmatprep.subr.bf16.mxu0 0
  %980 = vmatpush1.bf16.msra.mxu0 0
  %981 = vmatprep.subr.bf16.mxu0 0
  %982 = vmatpush1.bf16.msra.mxu0 0
  %983 = vmatprep.subr.bf16.mxu0 0
  %984 = vmatpush1.bf16.msra.mxu0 0
  %985 = vmatprep.subr.bf16.mxu0 0
  %986 = vmatpush1.bf16.msra.mxu0 0
  %987 = vmatprep.subr.bf16.mxu0 0
  %988 = vmatpush1.bf16.msra.mxu0 0
  %989 = vmatprep.subr.bf16.mxu0 0
  %990 = vmatpush1.bf16.msra.mxu0 0
  %991 = vmatprep.subr.bf16.mxu0 0
  %992 = vmatpush1.bf16.msra.mxu0 0
  %993 = vmatprep.mubr.bf16.mxu0 0
  %994 = vmatmul.mubr.bf16.gmra.mrb[0].mxu0 %v959
  %v995 = vpop.f32.mrb[0].mxu0
  %v996 = vadd.f32 %v47, %v995
  %v997 = vpop.f32.mrb[0].mxu0
  %v998 = vpop.f32.mrb[0].mxu0
  %v999 = vpop.f32.mrb[0].mxu0
  %1000 = vdwg.mxu0
  %1002 = vrot.lane.b32.xlu0 %v996, 120
  %v1003 = vpop.permute.xlu0 %1002
  %1005 = vrot.lane.b32.xlu0 %v996, 28
  %v1006 = vpop.permute.xlu0 %1005
  %vm1008 = vcmask 293888
  %v1009 = vsel %vm1008, %v1003, %v1006
  %v1010 = vlaneseq
  %v1011 = vshrl.u32 %v1010, 7
  %v1012 = vsub.s32 0, %v1011
  %v1013 = vrot.slane %v1009, %v1012
  %v1014 = vmul.f32 %v48, %v1013
  %v1016 = vsel %vm813, %v1014, 0
  %1018 = vmatprep.subr.mxu0 0.0
  %1019 = vmatpush1.msra.mxu0 %v49
  %1020 = vmatprep.subr.mxu0 0.0
  %1021 = vmatpush1.msra.mxu0 %v50
  %1022 = vmatprep.subr.mxu0 0.0
  %1023 = vmatpush1.msra.mxu0 %v51
  %1024 = vmatprep.subr.mxu0 0.0
  %1025 = vmatpush1.msra.mxu0 %v52
  %1026 = vmatprep.subr.mxu0 0.0
  %1027 = vmatpush1.msra.mxu0 %v53
  %1028 = vmatprep.subr.mxu0 0.0
  %1029 = vmatpush1.msra.mxu0 %v54
  %1030 = vmatprep.subr.mxu0 0.0
  %1031 = vmatpush1.msra.mxu0 %v55
  %1032 = vmatprep.subr.mxu0 0.0
  %1033 = vmatpush1.msra.mxu0 %v56
  %1034 = vmatprep.subr.mxu0 0.0
  %1035 = vmatpush1.msra.mxu0 %v57
  %1036 = vmatprep.subr.mxu0 0.0
  %1037 = vmatpush1.msra.mxu0 0.0
  %1038 = vmatprep.subr.mxu0 0.0
  %1039 = vmatpush1.msra.mxu0 0.0
  %1040 = vmatprep.subr.mxu0 0.0
  %1041 = vmatpush1.msra.mxu0 0.0
  %1042 = vmatprep.subr.mxu0 0.0
  %1043 = vmatpush1.msra.mxu0 0.0
  %1044 = vmatprep.subr.mxu0 0.0
  %1045 = vmatpush1.msra.mxu0 0.0
  %1046 = vmatprep.subr.mxu0 0.0
  %1047 = vmatpush1.msra.mxu0 0.0
  %1048 = vmatprep.subr.mxu0 0.0
  %1049 = vmatpush1.msra.mxu0 0.0
  %1050 = vmatprep.subr.mxu0 0.0
  %1051 = vmatpush1.msra.mxu0 0.0
  %1052 = vmatprep.subr.mxu0 0.0
  %1053 = vmatpush1.msra.mxu0 0.0
  %1054 = vmatprep.subr.mxu0 0.0
  %1055 = vmatpush1.msra.mxu0 0.0
  %1056 = vmatprep.subr.mxu0 0.0
  %1057 = vmatpush1.msra.mxu0 0.0
  %1058 = vmatprep.subr.mxu0 0.0
  %1059 = vmatpush1.msra.mxu0 0.0
  %1060 = vmatprep.subr.mxu0 0.0
  %1061 = vmatpush1.msra.mxu0 0.0
  %1062 = vmatprep.subr.mxu0 0.0
  %1063 = vmatpush1.msra.mxu0 0.0
  %1064 = vmatprep.subr.mxu0 0.0
  %1065 = vmatpush1.msra.mxu0 0.0
  %1066 = vmatprep.subr.mxu0 0.0
  %1067 = vmatpush1.msra.mxu0 0.0
  %1068 = vmatprep.subr.mxu0 0.0
  %1069 = vmatpush1.msra.mxu0 0.0
  %1070 = vmatprep.subr.mxu0 0.0
  %1071 = vmatpush1.msra.mxu0 0.0
  %1072 = vmatprep.subr.mxu0 0.0
  %1073 = vmatpush1.msra.mxu0 0.0
  %1074 = vmatprep.subr.mxu0 0.0
  %1075 = vmatpush1.msra.mxu0 0.0
  %1076 = vmatprep.subr.mxu0 0.0
  %1077 = vmatpush1.msra.mxu0 0.0
  %1078 = vmatprep.subr.mxu0 0.0
  %1079 = vmatpush1.msra.mxu0 0.0
  %1080 = vmatprep.subr.mxu0 0.0
  %1081 = vmatpush1.msra.mxu0 0.0
  %1082 = vmatprep.mubr.f32.mxu0 0.0
  %1083 = vmatmul.mubr.f32.gmra.mrb[0].mxu0 %v1016
  %v1084 = vpop.f32.mrb[0].mxu0
  %v1085 = vadd.f32 0.0, %v1084
  %v1086 = vpop.f32.mrb[0].mxu0
  %1087 = vdwg.mxu0
  %v1088 = vlaneseq
  %v1089 = vshrl.u32 %v1088, 7
  %v1090 = vlaneseq
  %v1091 = vand.u32 %v1090, 127
  %vm1092 = vcmp.eq.s32.totalorder %v1089, %v1091
  %v1093 = vsel %vm1092, 1, 0
  %v1094 = vcvt.s32.f32 %v1093
  %v1095 = vmul.f32 %v1085, 0.125
  %v1097 = vsel %vm77, %v1095, 0
  %1099 = vmatprep.subr.mxu0 0.0
  %1100 = vmatpush1.msra.mxu0 %v1095
  %1101 = vmatprep.subr.mxu0 0.0
  %1102 = vmatpush1.msra.mxu0 0.0
  %1103 = vmatprep.subr.mxu0 0.0
  %1104 = vmatpush1.msra.mxu0 0.0
  %1105 = vmatprep.subr.mxu0 0.0
  %1106 = vmatpush1.msra.mxu0 0.0
  %1107 = vmatprep.subr.mxu0 0.0
  %1108 = vmatpush1.msra.mxu0 0.0
  %1109 = vmatprep.subr.mxu0 0.0
  %1110 = vmatpush1.msra.mxu0 0.0
  %1111 = vmatprep.subr.mxu0 0.0
  %1112 = vmatpush1.msra.mxu0 0.0
  %1113 = vmatprep.subr.mxu0 0.0
  %1114 = vmatpush1.msra.mxu0 0.0
  %1115 = vmatprep.subr.mxu0 0.0
  %1116 = vmatpush1.msra.mxu0 0.0
  %1117 = vmatprep.subr.mxu0 0.0
  %1118 = vmatpush1.msra.mxu0 0.0
  %1119 = vmatprep.subr.mxu0 0.0
  %1120 = vmatpush1.msra.mxu0 0.0
  %1121 = vmatprep.subr.mxu0 0.0
  %1122 = vmatpush1.msra.mxu0 0.0
  %1123 = vmatprep.subr.mxu0 0.0
  %1124 = vmatpush1.msra.mxu0 0.0
  %1125 = vmatprep.subr.mxu0 0.0
  %1126 = vmatpush1.msra.mxu0 0.0
  %1127 = vmatprep.subr.mxu0 0.0
  %1128 = vmatpush1.msra.mxu0 0.0
  %1129 = vmatprep.subr.mxu0 0.0
  %1130 = vmatpush1.msra.mxu0 0.0
  %1131 = vmatprep.subr.mxu0 0.0
  %1132 = vmatpush1.msra.mxu0 0.0
  %1133 = vmatprep.subr.mxu0 0.0
  %1134 = vmatpush1.msra.mxu0 0.0
  %1135 = vmatprep.subr.mxu0 0.0
  %1136 = vmatpush1.msra.mxu0 0.0
  %1137 = vmatprep.subr.mxu0 0.0
  %1138 = vmatpush1.msra.mxu0 0.0
  %1139 = vmatprep.subr.mxu0 0.0
  %1140 = vmatpush1.msra.mxu0 0.0
  %1141 = vmatprep.subr.mxu0 0.0
  %1142 = vmatpush1.msra.mxu0 0.0
  %1143 = vmatprep.subr.mxu0 0.0
  %1144 = vmatpush1.msra.mxu0 0.0
  %1145 = vmatprep.subr.mxu0 0.0
  %1146 = vmatpush1.msra.mxu0 0.0
  %1147 = vmatprep.subr.mxu0 0.0
  %1148 = vmatpush1.msra.mxu0 0.0
  %1149 = vmatprep.subr.mxu0 0.0
  %1150 = vmatpush1.msra.mxu0 0.0
  %1151 = vmatprep.subr.mxu0 0.0
  %1152 = vmatpush1.msra.mxu0 0.0
  %1153 = vmatprep.subr.mxu0 0.0
  %1154 = vmatpush1.msra.mxu0 0.0
  %1155 = vmatprep.subr.mxu0 0.0
  %1156 = vmatpush1.msra.mxu0 0.0
  %1157 = vmatprep.subr.mxu0 0.0
  %1158 = vmatpush1.msra.mxu0 0.0
  %1159 = vmatprep.subr.mxu0 0.0
  %1160 = vmatpush1.msra.mxu0 0.0
  %1161 = vmatprep.subr.mxu0 0.0
  %1162 = vmatpush1.msra.mxu0 0.0
  %1163 = vmatprep.mubr.f32.mxu0 0.0
  %1164 = vmatmul.mubr.f32.gmra.mrb[0].mxu0 %v1097
  %v1165 = vpop.f32.mrb[0].mxu0
  %v1166 = vadd.f32 0.0, %v1165
  %v1167 = vpop.f32.mrb[0].mxu0
  %1168 = vdwg.mxu0
  %1170 = vrot.lane.b32.xlu0 %v1166, 8
  %v1171 = vpop.permute.xlu0 %1170
  %v1173 = vsel %vm77, %v1095, %v1171
  %v1174 = vsel %vm77, %v1166, 0
  %1176 = vmatprep.subr.mxu0 0.0
  %1177 = vmatpush1.msra.mxu0 %v1173
  %1178 = vmatprep.subr.mxu0 0.0
  %1179 = vmatpush1.msra.mxu0 0.0
  %1180 = vmatprep.subr.mxu0 0.0
  %1181 = vmatpush1.msra.mxu0 0.0
  %1182 = vmatprep.subr.mxu0 0.0
  %1183 = vmatpush1.msra.mxu0 0.0
  %1184 = vmatprep.subr.mxu0 0.0
  %1185 = vmatpush1.msra.mxu0 0.0
  %1186 = vmatprep.subr.mxu0 0.0
  %1187 = vmatpush1.msra.mxu0 0.0
  %1188 = vmatprep.subr.mxu0 0.0
  %1189 = vmatpush1.msra.mxu0 0.0
  %1190 = vmatprep.subr.mxu0 0.0
  %1191 = vmatpush1.msra.mxu0 0.0
  %1192 = vmatprep.subr.mxu0 0.0
  %1193 = vmatpush1.msra.mxu0 0.0
  %1194 = vmatprep.subr.mxu0 0.0
  %1195 = vmatpush1.msra.mxu0 0.0
  %1196 = vmatprep.subr.mxu0 0.0
  %1197 = vmatpush1.msra.mxu0 0.0
  %1198 = vmatprep.subr.mxu0 0.0
  %1199 = vmatpush1.msra.mxu0 0.0
  %1200 = vmatprep.subr.mxu0 0.0
  %1201 = vmatpush1.msra.mxu0 0.0
  %1202 = vmatprep.subr.mxu0 0.0
  %1203 = vmatpush1.msra.mxu0 0.0
  %1204 = vmatprep.subr.mxu0 0.0
  %1205 = vmatpush1.msra.mxu0 0.0
  %1206 = vmatprep.subr.mxu0 0.0
  %1207 = vmatpush1.msra.mxu0 0.0
  %1208 = vmatprep.subr.mxu0 0.0
  %1209 = vmatpush1.msra.mxu0 0.0
  %1210 = vmatprep.subr.mxu0 0.0
  %1211 = vmatpush1.msra.mxu0 0.0
  %1212 = vmatprep.subr.mxu0 0.0
  %1213 = vmatpush1.msra.mxu0 0.0
  %1214 = vmatprep.subr.mxu0 0.0
  %1215 = vmatpush1.msra.mxu0 0.0
  %1216 = vmatprep.subr.mxu0 0.0
  %1217 = vmatpush1.msra.mxu0 0.0
  %1218 = vmatprep.subr.mxu0 0.0
  %1219 = vmatpush1.msra.mxu0 0.0
  %1220 = vmatprep.subr.mxu0 0.0
  %1221 = vmatpush1.msra.mxu0 0.0
  %1222 = vmatprep.subr.mxu0 0.0
  %1223 = vmatpush1.msra.mxu0 0.0
  %1224 = vmatprep.subr.mxu0 0.0
  %1225 = vmatpush1.msra.mxu0 0.0
  %1226 = vmatprep.subr.mxu0 0.0
  %1227 = vmatpush1.msra.mxu0 0.0
  %1228 = vmatprep.subr.mxu0 0.0
  %1229 = vmatpush1.msra.mxu0 0.0
  %1230 = vmatprep.subr.mxu0 0.0
  %1231 = vmatpush1.msra.mxu0 0.0
  %1232 = vmatprep.subr.mxu0 0.0
  %1233 = vmatpush1.msra.mxu0 0.0
  %1234 = vmatprep.subr.mxu0 0.0
  %1235 = vmatpush1.msra.mxu0 0.0
  %1236 = vmatprep.subr.mxu0 0.0
  %1237 = vmatpush1.msra.mxu0 0.0
  %1238 = vmatprep.subr.mxu0 0.0
  %1239 = vmatpush1.msra.mxu0 0.0
  %1240 = vmatprep.mubr.f32.mxu0 0.0
  %1241 = vmatmul.mubr.f32.gmra.mrb[0].mxu0 %v1174
  %v1242 = vpop.f32.mrb[0].mxu0
  %v1243 = vadd.f32 0.0, %v1242
  %v1244 = vpop.f32.mrb[0].mxu0
  %1245 = vdwg.mxu0
  %v1246 = vadd.f32 %v1094, %v1095
  %v1247 = vmul.f32 %v1166, 0.5
  %v1248 = vadd.f32 %v1246, %v1247
  %v1249 = vmul.f32 %v1243, 0.16666667
  %v1250 = vadd.f32 %v1248, %v1249
  %v1251 = vmul.f32 %v1094, 0.041666668
  %v1252 = vmul.f32 %v1095, 0.008333334
  %v1253 = vadd.f32 %v1251, %v1252
  %v1254 = vmul.f32 %v1166, 0.0013888889
  %v1255 = vadd.f32 %v1253, %v1254
  %v1256 = vmul.f32 %v1243, 0.0001984127
  %v1257 = vadd.f32 %v1255, %v1256
  %v1258 = vmul.f32 %v1094, 2.4801588e-05
  %v1259 = vmul.f32 %v1095, 2.7557319e-06
  %v1260 = vadd.f32 %v1258, %v1259
  %v1261 = vmul.f32 %v1166, 2.755732e-07
  %v1262 = vadd.f32 %v1260, %v1261
  %v1263 = vmul.f32 %v1243, 2.5052108e-08
  %v1264 = vadd.f32 %v1262, %v1263
  %v1265 = vmul.f32 %v1243, 2.0876756e-09
  %1267 = vrot.lane.b32.xlu0 %v1264, 8
  %v1268 = vpop.permute.xlu0 %1267
  %v1270 = vadd.f32 %v1265, %v1268
  %1272 = vrot.lane.b32.xlu0 %v1270, 120
  %v1273 = vpop.permute.xlu0 %1272
  %1275 = vrot.lane.b32.xlu0 %v1243, 120
  %v1276 = vpop.permute.xlu0 %1275
  %v1278 = vsel %vm77, %v1273, 0
  %1280 = vmatprep.subr.mxu0 0.0
  %1281 = vmatpush1.msra.mxu0 %v1276
  %1282 = vmatprep.subr.mxu0 0.0
  %1283 = vmatpush1.msra.mxu0 0.0
  %1284 = vmatprep.subr.mxu0 0.0
  %1285 = vmatpush1.msra.mxu0 0.0
  %1286 = vmatprep.subr.mxu0 0.0
  %1287 = vmatpush1.msra.mxu0 0.0
  %1288 = vmatprep.subr.mxu0 0.0
  %1289 = vmatpush1.msra.mxu0 0.0
  %1290 = vmatprep.subr.mxu0 0.0
  %1291 = vmatpush1.msra.mxu0 0.0
  %1292 = vmatprep.subr.mxu0 0.0
  %1293 = vmatpush1.msra.mxu0 0.0
  %1294 = vmatprep.subr.mxu0 0.0
  %1295 = vmatpush1.msra.mxu0 0.0
  %1296 = vmatprep.subr.mxu0 0.0
  %1297 = vmatpush1.msra.mxu0 0.0
  %1298 = vmatprep.subr.mxu0 0.0
  %1299 = vmatpush1.msra.mxu0 0.0
  %1300 = vmatprep.subr.mxu0 0.0
  %1301 = vmatpush1.msra.mxu0 0.0
  %1302 = vmatprep.subr.mxu0 0.0
  %1303 = vmatpush1.msra.mxu0 0.0
  %1304 = vmatprep.subr.mxu0 0.0
  %1305 = vmatpush1.msra.mxu0 0.0
  %1306 = vmatprep.subr.mxu0 0.0
  %1307 = vmatpush1.msra.mxu0 0.0
  %1308 = vmatprep.subr.mxu0 0.0
  %1309 = vmatpush1.msra.mxu0 0.0
  %1310 = vmatprep.subr.mxu0 0.0
  %1311 = vmatpush1.msra.mxu0 0.0
  %1312 = vmatprep.subr.mxu0 0.0
  %1313 = vmatpush1.msra.mxu0 0.0
  %1314 = vmatprep.subr.mxu0 0.0
  %1315 = vmatpush1.msra.mxu0 0.0
  %1316 = vmatprep.subr.mxu0 0.0
  %1317 = vmatpush1.msra.mxu0 0.0
  %1318 = vmatprep.subr.mxu0 0.0
  %1319 = vmatpush1.msra.mxu0 0.0
  %1320 = vmatprep.subr.mxu0 0.0
  %1321 = vmatpush1.msra.mxu0 0.0
  %1322 = vmatprep.subr.mxu0 0.0
  %1323 = vmatpush1.msra.mxu0 0.0
  %1324 = vmatprep.subr.mxu0 0.0
  %1325 = vmatpush1.msra.mxu0 0.0
  %1326 = vmatprep.subr.mxu0 0.0
  %1327 = vmatpush1.msra.mxu0 0.0
  %1328 = vmatprep.subr.mxu0 0.0
  %1329 = vmatpush1.msra.mxu0 0.0
  %1330 = vmatprep.subr.mxu0 0.0
  %1331 = vmatpush1.msra.mxu0 0.0
  %1332 = vmatprep.subr.mxu0 0.0
  %1333 = vmatpush1.msra.mxu0 0.0
  %1334 = vmatprep.subr.mxu0 0.0
  %1335 = vmatpush1.msra.mxu0 0.0
  %1336 = vmatprep.subr.mxu0 0.0
  %1337 = vmatpush1.msra.mxu0 0.0
  %1338 = vmatprep.subr.mxu0 0.0
  %1339 = vmatpush1.msra.mxu0 0.0
  %1340 = vmatprep.subr.mxu0 0.0
  %1341 = vmatpush1.msra.mxu0 0.0
  %1342 = vmatprep.subr.mxu0 0.0
  %1343 = vmatpush1.msra.mxu0 0.0
  %1344 = vmatprep.mubr.f32.mxu0 0.0
  %1345 = vmatmul.mubr.f32.gmra.mrb[0].mxu0 %v1278
  %v1346 = vpop.f32.mrb[0].mxu0
  %v1347 = vadd.f32 %v1257, %v1346
  %v1348 = vpop.f32.mrb[0].mxu0
  %1349 = vdwg.mxu0
  %v1351 = vsel %vm77, %v1347, 0
  %1353 = vmatprep.subr.mxu0 0.0
  %1354 = vmatpush1.msra.mxu0 %v1276
  %1355 = vmatprep.subr.mxu0 0.0
  %1356 = vmatpush1.msra.mxu0 0.0
  %1357 = vmatprep.subr.mxu0 0.0
  %1358 = vmatpush1.msra.mxu0 0.0
  %1359 = vmatprep.subr.mxu0 0.0
  %1360 = vmatpush1.msra.mxu0 0.0
  %1361 = vmatprep.subr.mxu0 0.0
  %1362 = vmatpush1.msra.mxu0 0.0
  %1363 = vmatprep.subr.mxu0 0.0
  %1364 = vmatpush1.msra.mxu0 0.0
  %1365 = vmatprep.subr.mxu0 0.0
  %1366 = vmatpush1.msra.mxu0 0.0
  %1367 = vmatprep.subr.mxu0 0.0
  %1368 = vmatpush1.msra.mxu0 0.0
  %1369 = vmatprep.subr.mxu0 0.0
  %1370 = vmatpush1.msra.mxu0 0.0
  %1371 = vmatprep.subr.mxu0 0.0
  %1372 = vmatpush1.msra.mxu0 0.0
  %1373 = vmatprep.subr.mxu0 0.0
  %1374 = vmatpush1.msra.mxu0 0.0
  %1375 = vmatprep.subr.mxu0 0.0
  %1376 = vmatpush1.msra.mxu0 0.0
  %1377 = vmatprep.subr.mxu0 0.0
  %1378 = vmatpush1.msra.mxu0 0.0
  %1379 = vmatprep.subr.mxu0 0.0
  %1380 = vmatpush1.msra.mxu0 0.0
  %1381 = vmatprep.subr.mxu0 0.0
  %1382 = vmatpush1.msra.mxu0 0.0
  %1383 = vmatprep.subr.mxu0 0.0
  %1384 = vmatpush1.msra.mxu0 0.0
  %1385 = vmatprep.subr.mxu0 0.0
  %1386 = vmatpush1.msra.mxu0 0.0
  %1387 = vmatprep.subr.mxu0 0.0
  %1388 = vmatpush1.msra.mxu0 0.0
  %1389 = vmatprep.subr.mxu0 0.0
  %1390 = vmatpush1.msra.mxu0 0.0
  %1391 = vmatprep.subr.mxu0 0.0
  %1392 = vmatpush1.msra.mxu0 0.0
  %1393 = vmatprep.subr.mxu0 0.0
  %1394 = vmatpush1.msra.mxu0 0.0
  %1395 = vmatprep.subr.mxu0 0.0
  %1396 = vmatpush1.msra.mxu0 0.0
  %1397 = vmatprep.subr.mxu0 0.0
  %1398 = vmatpush1.msra.mxu0 0.0
  %1399 = vmatprep.subr.mxu0 0.0
  %1400 = vmatpush1.msra.mxu0 0.0
  %1401 = vmatprep.subr.mxu0 0.0
  %1402 = vmatpush1.msra.mxu0 0.0
  %1403 = vmatprep.subr.mxu0 0.0
  %1404 = vmatpush1.msra.mxu0 0.0
  %1405 = vmatprep.subr.mxu0 0.0
  %1406 = vmatpush1.msra.mxu0 0.0
  %1407 = vmatprep.subr.mxu0 0.0
  %1408 = vmatpush1.msra.mxu0 0.0
  %1409 = vmatprep.subr.mxu0 0.0
  %1410 = vmatpush1.msra.mxu0 0.0
  %1411 = vmatprep.subr.mxu0 0.0
  %1412 = vmatpush1.msra.mxu0 0.0
  %1413 = vmatprep.subr.mxu0 0.0
  %1414 = vmatpush1.msra.mxu0 0.0
  %1415 = vmatprep.subr.mxu0 0.0
  %1416 = vmatpush1.msra.mxu0 0.0
  %1417 = vmatprep.mubr.f32.mxu0 0.0
  %1418 = vmatmul.mubr.f32.gmra.mrb[0].mxu0 %v1351
  %v1419 = vpop.f32.mrb[0].mxu0
  %v1420 = vadd.f32 %v1250, %v1419
  %v1421 = vpop.f32.mrb[0].mxu0
  %1422 = vdwg.mxu0
  %v1424 = vsel %vm77, %v1420, 0
  %1426 = vmatprep.subr.mxu0 0.0
  %1427 = vmatpush1.msra.mxu0 %v1420
  %1428 = vmatprep.subr.mxu0 0.0
  %1429 = vmatpush1.msra.mxu0 0.0
  %1430 = vmatprep.subr.mxu0 0.0
  %1431 = vmatpush1.msra.mxu0 0.0
  %1432 = vmatprep.subr.mxu0 0.0
  %1433 = vmatpush1.msra.mxu0 0.0
  %1434 = vmatprep.subr.mxu0 0.0
  %1435 = vmatpush1.msra.mxu0 0.0
  %1436 = vmatprep.subr.mxu0 0.0
  %1437 = vmatpush1.msra.mxu0 0.0
  %1438 = vmatprep.subr.mxu0 0.0
  %1439 = vmatpush1.msra.mxu0 0.0
  %1440 = vmatprep.subr.mxu0 0.0
  %1441 = vmatpush1.msra.mxu0 0.0
  %1442 = vmatprep.subr.mxu0 0.0
  %1443 = vmatpush1.msra.mxu0 0.0
  %1444 = vmatprep.subr.mxu0 0.0
  %1445 = vmatpush1.msra.mxu0 0.0
  %1446 = vmatprep.subr.mxu0 0.0
  %1447 = vmatpush1.msra.mxu0 0.0
  %1448 = vmatprep.subr.mxu0 0.0
  %1449 = vmatpush1.msra.mxu0 0.0
  %1450 = vmatprep.subr.mxu0 0.0
  %1451 = vmatpush1.msra.mxu0 0.0
  %1452 = vmatprep.subr.mxu0 0.0
  %1453 = vmatpush1.msra.mxu0 0.0
  %1454 = vmatprep.subr.mxu0 0.0
  %1455 = vmatpush1.msra.mxu0 0.0
  %1456 = vmatprep.subr.mxu0 0.0
  %1457 = vmatpush1.msra.mxu0 0.0
  %1458 = vmatprep.subr.mxu0 0.0
  %1459 = vmatpush1.msra.mxu0 0.0
  %1460 = vmatprep.subr.mxu0 0.0
  %1461 = vmatpush1.msra.mxu0 0.0
  %1462 = vmatprep.subr.mxu0 0.0
  %1463 = vmatpush1.msra.mxu0 0.0
  %1464 = vmatprep.subr.mxu0 0.0
  %1465 = vmatpush1.msra.mxu0 0.0
  %1466 = vmatprep.subr.mxu0 0.0
  %1467 = vmatpush1.msra.mxu0 0.0
  %1468 = vmatprep.subr.mxu0 0.0
  %1469 = vmatpush1.msra.mxu0 0.0
  %1470 = vmatprep.subr.mxu0 0.0
  %1471 = vmatpush1.msra.mxu0 0.0
  %1472 = vmatprep.subr.mxu0 0.0
  %1473 = vmatpush1.msra.mxu0 0.0
  %1474 = vmatprep.subr.mxu0 0.0
  %1475 = vmatpush1.msra.mxu0 0.0
  %1476 = vmatprep.subr.mxu0 0.0
  %1477 = vmatpush1.msra.mxu0 0.0
  %1478 = vmatprep.subr.mxu0 0.0
  %1479 = vmatpush1.msra.mxu0 0.0
  %1480 = vmatprep.subr.mxu0 0.0
  %1481 = vmatpush1.msra.mxu0 0.0
  %1482 = vmatprep.subr.mxu0 0.0
  %1483 = vmatpush1.msra.mxu0 0.0
  %1484 = vmatprep.subr.mxu0 0.0
  %1485 = vmatpush1.msra.mxu0 0.0
  %1486 = vmatprep.subr.mxu0 0.0
  %1487 = vmatpush1.msra.mxu0 0.0
  %1488 = vmatprep.subr.mxu0 0.0
  %1489 = vmatpush1.msra.mxu0 0.0
  %1490 = vmatprep.mubr.f32.mxu0 0.0
  %1491 = vmatmul.mubr.f32.gmra.mrb[0].mxu0 %v1424
  %v1492 = vpop.f32.mrb[0].mxu0
  %v1493 = vadd.f32 0.0, %v1492
  %v1494 = vpop.f32.mrb[0].mxu0
  %1495 = vdwg.mxu0
  %v1497 = vsel %vm77, %v1493, 0
  %1499 = vmatprep.subr.mxu0 0.0
  %1500 = vmatpush1.msra.mxu0 %v1493
  %1501 = vmatprep.subr.mxu0 0.0
  %1502 = vmatpush1.msra.mxu0 0.0
  %1503 = vmatprep.subr.mxu0 0.0
  %1504 = vmatpush1.msra.mxu0 0.0
  %1505 = vmatprep.subr.mxu0 0.0
  %1506 = vmatpush1.msra.mxu0 0.0
  %1507 = vmatprep.subr.mxu0 0.0
  %1508 = vmatpush1.msra.mxu0 0.0
  %1509 = vmatprep.subr.mxu0 0.0
  %1510 = vmatpush1.msra.mxu0 0.0
  %1511 = vmatprep.subr.mxu0 0.0
  %1512 = vmatpush1.msra.mxu0 0.0
  %1513 = vmatprep.subr.mxu0 0.0
  %1514 = vmatpush1.msra.mxu0 0.0
  %1515 = vmatprep.subr.mxu0 0.0
  %1516 = vmatpush1.msra.mxu0 0.0
  %1517 = vmatprep.subr.mxu0 0.0
  %1518 = vmatpush1.msra.mxu0 0.0
  %1519 = vmatprep.subr.mxu0 0.0
  %1520 = vmatpush1.msra.mxu0 0.0
  %1521 = vmatprep.subr.mxu0 0.0
  %1522 = vmatpush1.msra.mxu0 0.0
  %1523 = vmatprep.subr.mxu0 0.0
  %1524 = vmatpush1.msra.mxu0 0.0
  %1525 = vmatprep.subr.mxu0 0.0
  %1526 = vmatpush1.msra.mxu0 0.0
  %1527 = vmatprep.subr.mxu0 0.0
  %1528 = vmatpush1.msra.mxu0 0.0
  %1529 = vmatprep.subr.mxu0 0.0
  %1530 = vmatpush1.msra.mxu0 0.0
  %1531 = vmatprep.subr.mxu0 0.0
  %1532 = vmatpush1.msra.mxu0 0.0
  %1533 = vmatprep.subr.mxu0 0.0
  %1534 = vmatpush1.msra.mxu0 0.0
  %1535 = vmatprep.subr.mxu0 0.0
  %1536 = vmatpush1.msra.mxu0 0.0
  %1537 = vmatprep.subr.mxu0 0.0
  %1538 = vmatpush1.msra.mxu0 0.0
  %1539 = vmatprep.subr.mxu0 0.0
  %1540 = vmatpush1.msra.mxu0 0.0
  %1541 = vmatprep.subr.mxu0 0.0
  %1542 = vmatpush1.msra.mxu0 0.0
  %1543 = vmatprep.subr.mxu0 0.0
  %1544 = vmatpush1.msra.mxu0 0.0
  %1545 = vmatprep.subr.mxu0 0.0
  %1546 = vmatpush1.msra.mxu0 0.0
  %1547 = vmatprep.subr.mxu0 0.0
  %1548 = vmatpush1.msra.mxu0 0.0
  %1549 = vmatprep.subr.mxu0 0.0
  %1550 = vmatpush1.msra.mxu0 0.0
  %1551 = vmatprep.subr.mxu0 0.0
  %1552 = vmatpush1.msra.mxu0 0.0
  %1553 = vmatprep.subr.mxu0 0.0
  %1554 = vmatpush1.msra.mxu0 0.0
  %1555 = vmatprep.subr.mxu0 0.0
  %1556 = vmatpush1.msra.mxu0 0.0
  %1557 = vmatprep.subr.mxu0 0.0
  %1558 = vmatpush1.msra.mxu0 0.0
  %1559 = vmatprep.subr.mxu0 0.0
  %1560 = vmatpush1.msra.mxu0 0.0
  %1561 = vmatprep.subr.mxu0 0.0
  %1562 = vmatpush1.msra.mxu0 0.0
  %1563 = vmatprep.mubr.f32.mxu0 0.0
  %1564 = vmatmul.mubr.f32.gmra.mrb[0].mxu0 %v1497
  %v1565 = vpop.f32.mrb[0].mxu0
  %v1566 = vadd.f32 0.0, %v1565
  %v1567 = vpop.f32.mrb[0].mxu0
  %1568 = vdwg.mxu0
  %v1570 = vsel %vm77, %v1566, 0
  %1572 = vmatprep.subr.mxu0 0.0
  %1573 = vmatpush1.msra.mxu0 %v1566
  %1574 = vmatprep.subr.mxu0 0.0
  %1575 = vmatpush1.msra.mxu0 0.0
  %1576 = vmatprep.subr.mxu0 0.0
  %1577 = vmatpush1.msra.mxu0 0.0
  %1578 = vmatprep.subr.mxu0 0.0
  %1579 = vmatpush1.msra.mxu0 0.0
  %1580 = vmatprep.subr.mxu0 0.0
  %1581 = vmatpush1.msra.mxu0 0.0
  %1582 = vmatprep.subr.mxu0 0.0
  %1583 = vmatpush1.msra.mxu0 0.0
  %1584 = vmatprep.subr.mxu0 0.0
  %1585 = vmatpush1.msra.mxu0 0.0
  %1586 = vmatprep.subr.mxu0 0.0
  %1587 = vmatpush1.msra.mxu0 0.0
  %1588 = vmatprep.subr.mxu0 0.0
  %1589 = vmatpush1.msra.mxu0 0.0
  %1590 = vmatprep.subr.mxu0 0.0
  %1591 = vmatpush1.msra.mxu0 0.0
  %1592 = vmatprep.subr.mxu0 0.0
  %1593 = vmatpush1.msra.mxu0 0.0
  %1594 = vmatprep.subr.mxu0 0.0
  %1595 = vmatpush1.msra.mxu0 0.0
  %1596 = vmatprep.subr.mxu0 0.0
  %1597 = vmatpush1.msra.mxu0 0.0
  %1598 = vmatprep.subr.mxu0 0.0
  %1599 = vmatpush1.msra.mxu0 0.0
  %1600 = vmatprep.subr.mxu0 0.0
  %1601 = vmatpush1.msra.mxu0 0.0
  %1602 = vmatprep.subr.mxu0 0.0
  %1603 = vmatpush1.msra.mxu0 0.0
  %1604 = vmatprep.subr.mxu0 0.0
  %1605 = vmatpush1.msra.mxu0 0.0
  %1606 = vmatprep.subr.mxu0 0.0
  %1607 = vmatpush1.msra.mxu0 0.0
  %1608 = vmatprep.subr.mxu0 0.0
  %1609 = vmatpush1.msra.mxu0 0.0
  %1610 = vmatprep.subr.mxu0 0.0
  %1611 = vmatpush1.msra.mxu0 0.0
  %1612 = vmatprep.subr.mxu0 0.0
  %1613 = vmatpush1.msra.mxu0 0.0
  %1614 = vmatprep.subr.mxu0 0.0
  %1615 = vmatpush1.msra.mxu0 0.0
  %1616 = vmatprep.subr.mxu0 0.0
  %1617 = vmatpush1.msra.mxu0 0.0
  %1618 = vmatprep.subr.mxu0 0.0
  %1619 = vmatpush1.msra.mxu0 0.0
  %1620 = vmatprep.subr.mxu0 0.0
  %1621 = vmatpush1.msra.mxu0 0.0
  %1622 = vmatprep.subr.mxu0 0.0
  %1623 = vmatpush1.msra.mxu0 0.0
  %1624 = vmatprep.subr.mxu0 0.0
  %1625 = vmatpush1.msra.mxu0 0.0
  %1626 = vmatprep.subr.mxu0 0.0
  %1627 = vmatpush1.msra.mxu0 0.0
  %1628 = vmatprep.subr.mxu0 0.0
  %1629 = vmatpush1.msra.mxu0 0.0
  %1630 = vmatprep.subr.mxu0 0.0
  %1631 = vmatpush1.msra.mxu0 0.0
  %1632 = vmatprep.subr.mxu0 0.0
  %1633 = vmatpush1.msra.mxu0 0.0
  %1634 = vmatprep.subr.mxu0 0.0
  %1635 = vmatpush1.msra.mxu0 0.0
  %1636 = vmatprep.mubr.f32.mxu0 0.0
  %1637 = vmatmul.mubr.f32.gmra.mrb[0].mxu0 %v1570
  %v1638 = vpop.f32.mrb[0].mxu0
  %v1639 = vadd.f32 0.0, %v1638
  %v1640 = vpop.f32.mrb[0].mxu0
  %1641 = vdwg.mxu0
  %v1642 = vlaneseq
  %v1643 = vshrl.u32 %v1642, 7
  %v1644 = vsub.s32 0, %v1643
  %v1645 = vrot.slane %v996, %v1644
  %1647 = vrot.lane.b32.xlu0 %v1645, 8
  %v1648 = vpop.permute.xlu0 %1647
  %v1650 = vsel %vm77, %v1639, %v1648
  %vm1651 = vcmask 130048
  %v1652 = vsel %vm1651, %v1650, 0.0
  %1653 = vst [vmem:[%s3] sm:$0xff] %v1652
  // Predicated region
  $region14: #{inference_model_forward.1} parent=0 // pred_check
    _
  $region15: #{inference_model_forward.1} parent=0 // pred_check_branch
    %1655 = sbr.rel (0) target = $region17
  $region16: #{inference_model_forward.1} parent=0 // pred_region
    _
  $region17: #{inference_model_forward.1} parent=0 // pred_fallthru
    _
  // Predicated region
  $region18: #{inference_model_forward.1} parent=0 // pred_check
    _
  $region19: #{inference_model_forward.1} parent=0 // pred_check_branch
    %1657 = sbr.rel (0) target = $region21
  $region20: #{inference_model_forward.1} parent=0 // pred_region
    _
  $region21: #{inference_model_forward.1} parent=0 // pred_fallthru
    _

</llo_original>
